<compile_context>
chip_gen: v7x
topology: tpu7x:2x2x1
jax: 0.10.0
libtpu: 0.0.40
codegen_flags: <defaults>
</compile_context>

<pallas_src>
import functools

import jax
import jax.numpy as jnp
from jax.experimental import pallas as pl
from jax.experimental.pallas import tpu as pltpu


def _fire_kernel(x_ref, w1_ref, b1_ref, w2_ref, b2_ref, w3_ref, b3_ref,
                 s2_ref, t2_ref, s3_ref, t3_ref, out_ref,
                 *, W, TH, Cin, S, E1, E3):
    # x block: (1, 1, TH+2, W, Cin) in bf16  (TH band rows + 1 halo row each side)
    P = (TH + 2) * W
    band = pl.program_id(1)
    nb = pl.num_programs(1)

    # ---- squeeze: 1x1 conv == matmul over channels, then ReLU (f32 acc) -----
    x2d = x_ref[0, 0].reshape(P, Cin)                      # (P, Cin) bf16
    sq = jnp.dot(x2d, w1_ref[...], preferred_element_type=jnp.float32)
    sq = jnp.maximum(sq + b1_ref[...], 0.0)                # (P, S) f32
    # batchnorm1 output is never consumed by the torch forward -> not computed.

    # Zero the squeeze map on halo rows that fall outside the image, so the
    # 3x3 'same' conv sees true zero padding there (relu(b1) != 0 otherwise).
    p_idx = jax.lax.broadcasted_iota(jnp.int32, (P, 1), 0)
    top_ok = jnp.logical_or(band > 0, p_idx >= W)
    bot_ok = jnp.logical_or(band < nb - 1, p_idx < (TH + 1) * W)
    sq = jnp.where(jnp.logical_and(top_ok, bot_ok), sq, 0.0)

    # ---- branch A: 1x1 expand + ReLU + folded batchnorm2 (interior rows) ----
    sq_in = sq[W:W + TH * W].astype(jnp.bfloat16)          # (TH*W, S)
    e1 = jnp.dot(sq_in, w2_ref[...], preferred_element_type=jnp.float32)
    e1 = jnp.maximum(e1 + b2_ref[...], 0.0)
    e1 = e1 * s2_ref[...] + t2_ref[...]                    # (TH*W, E1)

    # ---- branch B: 3x3 'same' conv as one im2col matmul, K = 9*S ------------
    sq3 = sq.reshape(TH + 2, W, S)
    zcol = jnp.zeros((TH + 2, 1, S), jnp.float32)
    sq_pad = jnp.concatenate([zcol, sq3, zcol], axis=1)    # (TH+2, W+2, S)
    patches = [
        sq_pad[dy:dy + TH, dx:dx + W, :].reshape(TH * W, S)
        for dy in range(3) for dx in range(3)
    ]
    pat = jnp.concatenate(patches, axis=-1).astype(jnp.bfloat16)   # (TH*W, 9S)
    e3 = jnp.dot(pat, w3_ref[...], preferred_element_type=jnp.float32)
    e3 = jnp.maximum(e3 + b3_ref[...], 0.0)
    e3 = e3 * s3_ref[...] + t3_ref[...]                    # (TH*W, E3)

    # ---- write both branches straight into their output channel slices ------
    out_ref[0, :, :, :E1] = e1.reshape(TH, W, E1).astype(out_ref.dtype)
    out_ref[0, :, :, E1:] = e3.reshape(TH, W, E3).astype(out_ref.dtype)


def fire_module_pallas(x_nchw, params):
    (w1_t, b1, w2_t, b2, w3_t, b3,
     g2, be2, m2, v2, g3, be3, m3, v3) = params
    eps = 1e-5

    N, Cin, H, W = x_nchw.shape
    S = w1_t.shape[0]
    E1 = w2_t.shape[0]
    E3 = w3_t.shape[0]
    Cout = E1 + E3

    # Row-band tile height (multiple of 8 when possible).  For real problem
    # sizes sweep TH upward under the VMEM budget (double-buffered in/out
    # bands + weights must fit, esp. on v7x's 64 MiB VMEM).
    TH = 8 if (H % 8 == 0 and H > 8) else H
    nb = H // TH

    # ---- wrapper glue (plain JAX): layout, halo bands, BN folding -----------
    # TODO(synk): the NCHW<->NHWC transposes exist only to honor the PyTorch
    # interface; an NHWC end-to-end model would drop both HBM round trips.
    x_nhwc = jnp.transpose(x_nchw, (0, 2, 3, 1)).astype(jnp.bfloat16)
    x_halo = jnp.pad(x_nhwc, ((0, 0), (1, 1), (0, 0), (0, 0)))
    # Overlapping (TH+2)-row bands so every grid step carries its own 3x3 row
    # halo; duplicates only 2 rows per band of the (small, bf16) input.
    x_bands = jnp.stack(
        [x_halo[:, i * TH:i * TH + TH + 2] for i in range(nb)], axis=1)

    w1 = jnp.transpose(w1_t[:, :, 0, 0], (1, 0)).astype(jnp.bfloat16)      # (Cin, S)
    w2 = jnp.transpose(w2_t[:, :, 0, 0], (1, 0)).astype(jnp.bfloat16)      # (S, E1)
    # im2col weight: (dy, dx, s) flattened into one contiguous K = 9*S axis.
    w3 = jnp.transpose(w3_t, (2, 3, 1, 0)).reshape(9 * S, E3).astype(jnp.bfloat16)

    s2 = g2 / jnp.sqrt(v2 + eps)
    t2 = be2 - m2 * s2
    s3 = g3 / jnp.sqrt(v3 + eps)
    t3 = be3 - m3 * s3

    b1r, b2r, b3r = b1.reshape(1, S), b2.reshape(1, E1), b3.reshape(1, E3)
    s2r, t2r = s2.reshape(1, E1), t2.reshape(1, E1)
    s3r, t3r = s3.reshape(1, E3), t3.reshape(1, E3)

    kern = functools.partial(_fire_kernel, W=W, TH=TH, Cin=Cin,
                             S=S, E1=E1, E3=E3)
    const = lambda n, i: (0, 0)

    out_nhwc = pl.pallas_call(
        kern,
        out_shape=jax.ShapeDtypeStruct((N, H, W, Cout), jnp.float32),
        grid=(N, nb),
        in_specs=[
            pl.BlockSpec((1, 1, TH + 2, W, Cin), lambda n, i: (n, i, 0, 0, 0)),
            pl.BlockSpec((Cin, S), const),
            pl.BlockSpec((1, S), const),
            pl.BlockSpec((S, E1), const),
            pl.BlockSpec((1, E1), const),
            pl.BlockSpec((9 * S, E3), const),
            pl.BlockSpec((1, E3), const),
            pl.BlockSpec((1, E1), const),
            pl.BlockSpec((1, E1), const),
            pl.BlockSpec((1, E3), const),
            pl.BlockSpec((1, E3), const),
        ],
        out_specs=pl.BlockSpec((1, TH, W, Cout), lambda n, i: (n, i, 0, 0)),
        compiler_params=pltpu.CompilerParams(
            dimension_semantics=("parallel", "parallel"),
            vmem_limit_bytes=32 * 1024 * 1024),
    )(x_bands, w1, b1r, w2, b2r, w3, b3r, s2r, t2r, s3r, t3r)

    return jnp.transpose(out_nhwc, (0, 3, 1, 2))               # back to NCHW


def fire_module_reference(x_nchw, params):
    """Pure-JAX reference that mirrors the PyTorch (NCHW / OIHW) forward."""
    (w1_t, b1, w2_t, b2, w3_t, b3,
     g2, be2, m2, v2, g3, be3, m3, v3) = params
    eps = 1e-5

    def conv(x, w, b):
        y = jax.lax.conv_general_dilated(
            x, w, window_strides=(1, 1), padding='SAME',
            dimension_numbers=('NCHW', 'OIHW', 'NCHW'))
        return y + b[None, :, None, None]

    def bn(x, g, be, m, v):
        s = g / jnp.sqrt(v + eps)
        return x * s[None, :, None, None] + (be - m * s)[None, :, None, None]

    sq = jax.nn.relu(conv(x_nchw, w1_t, b1))
    e1 = bn(jax.nn.relu(conv(sq, w2_t, b2)), g2, be2, m2, v2)
    e3 = bn(jax.nn.relu(conv(sq, w3_t, b3)), g3, be3, m3, v3)
    return jnp.concatenate([e1, e3], axis=1)


def make_params(key, in_channels, s, e1, e3):
    ks = jax.random.split(key, 16)
    f32 = jnp.float32
    w1 = 0.1 * jax.random.normal(ks[0], (s, in_channels, 1, 1), f32)
    b1 = 0.1 * jax.random.normal(ks[1], (s,), f32)
    w2 = 0.1 * jax.random.normal(ks[2], (e1, s, 1, 1), f32)
    b2 = 0.1 * jax.random.normal(ks[3], (e1,), f32)
    w3 = 0.1 * jax.random.normal(ks[4], (e3, s, 3, 3), f32)
    b3 = 0.1 * jax.random.normal(ks[5], (e3,), f32)
    g2 = 1.0 + 0.1 * jax.random.normal(ks[6], (e1,), f32)
    be2 = 0.1 * jax.random.normal(ks[7], (e1,), f32)
    m2 = 0.1 * jax.random.normal(ks[8], (e1,), f32)
    v2 = 0.5 + 0.1 * jnp.abs(jax.random.normal(ks[9], (e1,), f32))
    g3 = 1.0 + 0.1 * jax.random.normal(ks[10], (e3,), f32)
    be3 = 0.1 * jax.random.normal(ks[11], (e3,), f32)
    m3 = 0.1 * jax.random.normal(ks[12], (e3,), f32)
    v3 = 0.5 + 0.1 * jnp.abs(jax.random.normal(ks[13], (e3,), f32))
    return (w1, b1, w2, b2, w3, b3, g2, be2, m2, v2, g3, be3, m3, v3)


if __name__ == "__main__":
    key = jax.random.PRNGKey(0)
    k_x, k_p = jax.random.split(key)

    N, Cin, H, W = 2, 4, 16, 16
    S, E1, E3 = 8, 8, 8          # conv1x1_1_size, conv1x1_2_size, conv3x3_size

    x = jax.random.normal(k_x, (N, Cin, H, W), jnp.float32)
    params = make_params(k_p, Cin, S, E1, E3)

    out = jax.block_until_ready(fire_module_pallas(x, params))
    ref = jax.block_until_ready(fire_module_reference(x, params))

    assert out.shape == (N, E1 + E3, H, W), out.shape
    # bf16 MXU inputs (f32 accumulation) vs. the all-f32 reference -> loose tol.
    max_err = float(jnp.max(jnp.abs(out - ref)))
    assert max_err < 2e-2, max_err

    print("KERNEL_OK")
</pallas_src>

<mosaic_0001>
module attributes {stable_mosaic.version = 11 : i64} {
  func.func @_fire_kernel(%arg0: i32, %arg1: i32, %arg2: memref<1x1x10x16x4xbf16, #tpu.memory_space<vmem>>, %arg3: memref<4x8xbf16, #tpu.memory_space<vmem>>, %arg4: memref<1x8xf32, #tpu.memory_space<vmem>>, %arg5: memref<8x8xbf16, #tpu.memory_space<vmem>>, %arg6: memref<1x8xf32, #tpu.memory_space<vmem>>, %arg7: memref<72x8xbf16, #tpu.memory_space<vmem>>, %arg8: memref<1x8xf32, #tpu.memory_space<vmem>>, %arg9: memref<1x8xf32, #tpu.memory_space<vmem>>, %arg10: memref<1x8xf32, #tpu.memory_space<vmem>>, %arg11: memref<1x8xf32, #tpu.memory_space<vmem>>, %arg12: memref<1x8xf32, #tpu.memory_space<vmem>>, %arg13: memref<1x8x16x16xf32, #tpu.memory_space<vmem>>) attributes {dimension_semantics = [#tpu.dimension_semantics<parallel>, #tpu.dimension_semantics<parallel>], iteration_bounds = array<i64: 2, 2>, scalar_prefetch = 0 : i64, scratch_operands = 0 : i64, tpu.core_type = #tpu.core_type<tc>, window_params = [{transform_indices = @transform_0, window_bounds = array<i64: 1, 1, 10, 16, 4>}, {pipeline_mode = #tpu.pipeline_mode<synchronous>, transform_indices = @transform_1, window_bounds = array<i64: 4, 8>}, {pipeline_mode = #tpu.pipeline_mode<synchronous>, transform_indices = @transform_2, window_bounds = array<i64: 1, 8>}, {pipeline_mode = #tpu.pipeline_mode<synchronous>, transform_indices = @transform_3, window_bounds = array<i64: 8, 8>}, {pipeline_mode = #tpu.pipeline_mode<synchronous>, transform_indices = @transform_4, window_bounds = array<i64: 1, 8>}, {pipeline_mode = #tpu.pipeline_mode<synchronous>, transform_indices = @transform_5, window_bounds = array<i64: 72, 8>}, {pipeline_mode = #tpu.pipeline_mode<synchronous>, transform_indices = @transform_6, window_bounds = array<i64: 1, 8>}, {pipeline_mode = #tpu.pipeline_mode<synchronous>, transform_indices = @transform_7, window_bounds = array<i64: 1, 8>}, {pipeline_mode = #tpu.pipeline_mode<synchronous>, transform_indices = @transform_8, window_bounds = array<i64: 1, 8>}, {pipeline_mode = #tpu.pipeline_mode<synchronous>, transform_indices = @transform_9, window_bounds = array<i64: 1, 8>}, {pipeline_mode = #tpu.pipeline_mode<synchronous>, transform_indices = @transform_10, window_bounds = array<i64: 1, 8>}, {transform_indices = @transform_11, window_bounds = array<i64: 1, 8, 16, 16>}]} {
    %c0 = arith.constant 0 : index
    %c0_0 = arith.constant 0 : index
    %c0_1 = arith.constant 0 : index
    %c0_2 = arith.constant 0 : index
    %c0_3 = arith.constant 0 : index
    %0 = vector.load %arg2[%c0, %c0_0, %c0_1, %c0_2, %c0_3] : memref<1x1x10x16x4xbf16, #tpu.memory_space<vmem>>, vector<1x1x10x16x4xbf16>
    %1 = vector.shape_cast %0 : vector<1x1x10x16x4xbf16> to vector<10x16x4xbf16>
    %2 = vector.shape_cast %1 : vector<10x16x4xbf16> to vector<160x4xbf16>
    %c0_4 = arith.constant 0 : index
    %c0_5 = arith.constant 0 : index
    %3 = vector.load %arg3[%c0_4, %c0_5] : memref<4x8xbf16, #tpu.memory_space<vmem>>, vector<4x8xbf16>
    %cst = arith.constant dense<0.000000e+00> : vector<160x8xf32>
    %4 = tpu.matmul %2, %3, %cst {dimension_numbers = #tpu.dot_dimension_numbers<[1], [0], [0], [1], [0, 0, 1, 1], [], []>} : vector<160x4xbf16>, vector<4x8xbf16>, vector<160x8xf32> -> vector<160x8xf32>
    %c0_6 = arith.constant 0 : index
    %c0_7 = arith.constant 0 : index
    %5 = vector.load %arg4[%c0_6, %c0_7] : memref<1x8xf32, #tpu.memory_space<vmem>>, vector<1x8xf32>
    %6 = vector.broadcast %5 : vector<1x8xf32> to vector<160x8xf32>
    %7 = arith.addf %4, %6 : vector<160x8xf32>
    %cst_8 = arith.constant 0.000000e+00 : f32
    %8 = vector.broadcast %cst_8 : f32 to vector<160x8xf32>
    %9 = arith.maximumf %7, %8 : vector<160x8xf32>
    %10 = tpu.iota {dimensions = array<i32: 0>} : vector<160x1xi32>
    %c0_i32 = arith.constant 0 : i32
    %11 = arith.cmpi sgt, %arg1, %c0_i32 : i32
    %c16_i32 = arith.constant 16 : i32
    %12 = vector.broadcast %c16_i32 : i32 to vector<160x1xi32>
    %13 = arith.cmpi sge, %10, %12 : vector<160x1xi32>
    %14 = vector.broadcast %11 : i1 to vector<160x1xi1>
    %15 = arith.ori %14, %13 : vector<160x1xi1>
    %c1_i32 = arith.constant 1 : i32
    %16 = arith.cmpi slt, %arg1, %c1_i32 : i32
    %c144_i32 = arith.constant 144 : i32
    %17 = vector.broadcast %c144_i32 : i32 to vector<160x1xi32>
    %18 = arith.cmpi slt, %10, %17 : vector<160x1xi32>
    %19 = vector.broadcast %16 : i1 to vector<160x1xi1>
    %20 = arith.ori %19, %18 : vector<160x1xi1>
    %21 = arith.andi %15, %20 : vector<160x1xi1>
    %cst_9 = arith.constant 0.000000e+00 : f32
    %22 = vector.shape_cast %21 : vector<160x1xi1> to vector<160x1xi1>
    %23 = vector.broadcast %22 : vector<160x1xi1> to vector<160x8xi1>
    %24 = vector.broadcast %cst_9 : f32 to vector<160x8xf32>
    %25 = arith.select %23, %9, %24 : vector<160x8xi1>, vector<160x8xf32>
    %26 = vector.extract_strided_slice %25 {offsets = [16, 0], sizes = [128, 8], strides = [1, 1]} : vector<160x8xf32> to vector<128x8xf32>
    %27 = arith.truncf %26 : vector<128x8xf32> to vector<128x8xbf16>
    %c0_10 = arith.constant 0 : index
    %c0_11 = arith.constant 0 : index
    %28 = vector.load %arg5[%c0_10, %c0_11] : memref<8x8xbf16, #tpu.memory_space<vmem>>, vector<8x8xbf16>
    %cst_12 = arith.constant dense<0.000000e+00> : vector<128x8xf32>
    %29 = tpu.matmul %27, %28, %cst_12 {dimension_numbers = #tpu.dot_dimension_numbers<[1], [0], [0], [1], [0, 0, 1, 1], [], []>} : vector<128x8xbf16>, vector<8x8xbf16>, vector<128x8xf32> -> vector<128x8xf32>
    %c0_13 = arith.constant 0 : index
    %c0_14 = arith.constant 0 : index
    %30 = vector.load %arg6[%c0_13, %c0_14] : memref<1x8xf32, #tpu.memory_space<vmem>>, vector<1x8xf32>
    %31 = vector.broadcast %30 : vector<1x8xf32> to vector<128x8xf32>
    %32 = arith.addf %29, %31 : vector<128x8xf32>
    %cst_15 = arith.constant 0.000000e+00 : f32
    %33 = vector.broadcast %cst_15 : f32 to vector<128x8xf32>
    %34 = arith.maximumf %32, %33 : vector<128x8xf32>
    %c0_16 = arith.constant 0 : index
    %c0_17 = arith.constant 0 : index
    %35 = vector.load %arg9[%c0_16, %c0_17] : memref<1x8xf32, #tpu.memory_space<vmem>>, vector<1x8xf32>
    %36 = vector.broadcast %35 : vector<1x8xf32> to vector<128x8xf32>
    %37 = arith.mulf %34, %36 : vector<128x8xf32>
    %c0_18 = arith.constant 0 : index
    %c0_19 = arith.constant 0 : index
    %38 = vector.load %arg10[%c0_18, %c0_19] : memref<1x8xf32, #tpu.memory_space<vmem>>, vector<1x8xf32>
    %39 = vector.broadcast %38 : vector<1x8xf32> to vector<128x8xf32>
    %40 = arith.addf %37, %39 : vector<128x8xf32>
    %41 = vector.shape_cast %25 : vector<160x8xf32> to vector<10x16x8xf32>
    %cst_20 = arith.constant 0.000000e+00 : f32
    %42 = vector.broadcast %cst_20 : f32 to vector<10x1x8xf32>
    %43 = tpu.concatenate %42, %41, %42 in 1 : vector<10x1x8xf32>, vector<10x16x8xf32>, vector<10x1x8xf32> -> vector<10x18x8xf32>
    %44 = vector.extract_strided_slice %43 {offsets = [0, 0, 0], sizes = [8, 16, 8], strides = [1, 1, 1]} : vector<10x18x8xf32> to vector<8x16x8xf32>
    %45 = vector.shape_cast %44 : vector<8x16x8xf32> to vector<128x8xf32>
    %46 = vector.extract_strided_slice %43 {offsets = [0, 1, 0], sizes = [8, 16, 8], strides = [1, 1, 1]} : vector<10x18x8xf32> to vector<8x16x8xf32>
    %47 = vector.shape_cast %46 : vector<8x16x8xf32> to vector<128x8xf32>
    %48 = vector.extract_strided_slice %43 {offsets = [0, 2, 0], sizes = [8, 16, 8], strides = [1, 1, 1]} : vector<10x18x8xf32> to vector<8x16x8xf32>
    %49 = vector.shape_cast %48 : vector<8x16x8xf32> to vector<128x8xf32>
    %50 = vector.extract_strided_slice %43 {offsets = [1, 0, 0], sizes = [8, 16, 8], strides = [1, 1, 1]} : vector<10x18x8xf32> to vector<8x16x8xf32>
    %51 = vector.shape_cast %50 : vector<8x16x8xf32> to vector<128x8xf32>
    %52 = vector.extract_strided_slice %43 {offsets = [1, 1, 0], sizes = [8, 16, 8], strides = [1, 1, 1]} : vector<10x18x8xf32> to vector<8x16x8xf32>
    %53 = vector.shape_cast %52 : vector<8x16x8xf32> to vector<128x8xf32>
    %54 = vector.extract_strided_slice %43 {offsets = [1, 2, 0], sizes = [8, 16, 8], strides = [1, 1, 1]} : vector<10x18x8xf32> to vector<8x16x8xf32>
    %55 = vector.shape_cast %54 : vector<8x16x8xf32> to vector<128x8xf32>
    %56 = vector.extract_strided_slice %43 {offsets = [2, 0, 0], sizes = [8, 16, 8], strides = [1, 1, 1]} : vector<10x18x8xf32> to vector<8x16x8xf32>
    %57 = vector.shape_cast %56 : vector<8x16x8xf32> to vector<128x8xf32>
    %58 = vector.extract_strided_slice %43 {offsets = [2, 1, 0], sizes = [8, 16, 8], strides = [1, 1, 1]} : vector<10x18x8xf32> to vector<8x16x8xf32>
    %59 = vector.shape_cast %58 : vector<8x16x8xf32> to vector<128x8xf32>
    %60 = vector.extract_strided_slice %43 {offsets = [2, 2, 0], sizes = [8, 16, 8], strides = [1, 1, 1]} : vector<10x18x8xf32> to vector<8x16x8xf32>
    %61 = vector.shape_cast %60 : vector<8x16x8xf32> to vector<128x8xf32>
    %62 = tpu.concatenate %45, %47, %49, %51, %53, %55, %57, %59, %61 in 1 : vector<128x8xf32>, vector<128x8xf32>, vector<128x8xf32>, vector<128x8xf32>, vector<128x8xf32>, vector<128x8xf32>, vector<128x8xf32>, vector<128x8xf32>, vector<128x8xf32> -> vector<128x72xf32>
    %63 = arith.truncf %62 : vector<128x72xf32> to vector<128x72xbf16>
    %c0_21 = arith.constant 0 : index
    %c0_22 = arith.constant 0 : index
    %64 = vector.load %arg7[%c0_21, %c0_22] : memref<72x8xbf16, #tpu.memory_space<vmem>>, vector<72x8xbf16>
    %cst_23 = arith.constant dense<0.000000e+00> : vector<128x8xf32>
    %65 = tpu.matmul %63, %64, %cst_23 {dimension_numbers = #tpu.dot_dimension_numbers<[1], [0], [0], [1], [0, 0, 1, 1], [], []>} : vector<128x72xbf16>, vector<72x8xbf16>, vector<128x8xf32> -> vector<128x8xf32>
    %c0_24 = arith.constant 0 : index
    %c0_25 = arith.constant 0 : index
    %66 = vector.load %arg8[%c0_24, %c0_25] : memref<1x8xf32, #tpu.memory_space<vmem>>, vector<1x8xf32>
    %67 = vector.broadcast %66 : vector<1x8xf32> to vector<128x8xf32>
    %68 = arith.addf %65, %67 : vector<128x8xf32>
    %cst_26 = arith.constant 0.000000e+00 : f32
    %69 = vector.broadcast %cst_26 : f32 to vector<128x8xf32>
    %70 = arith.maximumf %68, %69 : vector<128x8xf32>
    %c0_27 = arith.constant 0 : index
    %c0_28 = arith.constant 0 : index
    %71 = vector.load %arg11[%c0_27, %c0_28] : memref<1x8xf32, #tpu.memory_space<vmem>>, vector<1x8xf32>
    %72 = vector.broadcast %71 : vector<1x8xf32> to vector<128x8xf32>
    %73 = arith.mulf %70, %72 : vector<128x8xf32>
    %c0_29 = arith.constant 0 : index
    %c0_30 = arith.constant 0 : index
    %74 = vector.load %arg12[%c0_29, %c0_30] : memref<1x8xf32, #tpu.memory_space<vmem>>, vector<1x8xf32>
    %75 = vector.broadcast %74 : vector<1x8xf32> to vector<128x8xf32>
    %76 = arith.addf %73, %75 : vector<128x8xf32>
    %77 = vector.shape_cast %40 : vector<128x8xf32> to vector<8x16x8xf32>
    %c0_31 = arith.constant 0 : index
    %c0_32 = arith.constant 0 : index
    %c0_33 = arith.constant 0 : index
    %c0_34 = arith.constant 0 : index
    %78 = vector.load %arg13[%c0_31, %c0_32, %c0_33, %c0_34] : memref<1x8x16x16xf32, #tpu.memory_space<vmem>>, vector<1x8x16x8xf32>
    %79 = vector.shape_cast %78 : vector<1x8x16x8xf32> to vector<8x16x8xf32>
    %80 = vector.shape_cast %77 : vector<8x16x8xf32> to vector<1x8x16x8xf32>
    tpu.vector_store %arg13[%c0_31, %c0_32, %c0_33, %c0_34], %80 {strides = array<i32>} : memref<1x8x16x16xf32, #tpu.memory_space<vmem>>, vector<1x8x16x8xf32>,
    %81 = vector.shape_cast %76 : vector<128x8xf32> to vector<8x16x8xf32>
    %c0_35 = arith.constant 0 : index
    %c0_36 = arith.constant 0 : index
    %c0_37 = arith.constant 0 : index
    %c8 = arith.constant 8 : index
    %82 = vector.load %arg13[%c0_35, %c0_36, %c0_37, %c8] : memref<1x8x16x16xf32, #tpu.memory_space<vmem>>, vector<1x8x16x8xf32>
    %83 = vector.shape_cast %82 : vector<1x8x16x8xf32> to vector<8x16x8xf32>
    %84 = vector.shape_cast %81 : vector<8x16x8xf32> to vector<1x8x16x8xf32>
    tpu.vector_store %arg13[%c0_35, %c0_36, %c0_37, %c8], %84 {strides = array<i32>} : memref<1x8x16x16xf32, #tpu.memory_space<vmem>>, vector<1x8x16x8xf32>,
    return
  }
  func.func @transform_0(%arg0: i32, %arg1: i32) -> (i32, i32, i32, i32, i32) {
    %c0_i32 = arith.constant 0 : i32
    %c0_i32_0 = arith.constant 0 : i32
    %c0_i32_1 = arith.constant 0 : i32
    %c0_i32_2 = arith.constant 0 : i32
    return %arg0, %arg1, %c0_i32, %c0_i32_0, %c0_i32_1 : i32, i32, i32, i32, i32
  }
  func.func @transform_1(%arg0: i32, %arg1: i32) -> (i32, i32) {
    %c0_i32 = arith.constant 0 : i32
    %c0_i32_0 = arith.constant 0 : i32
    %c0_i32_1 = arith.constant 0 : i32
    return %c0_i32, %c0_i32_0 : i32, i32
  }
  func.func @transform_2(%arg0: i32, %arg1: i32) -> (i32, i32) {
    %c0_i32 = arith.constant 0 : i32
    %c0_i32_0 = arith.constant 0 : i32
    %c0_i32_1 = arith.constant 0 : i32
    return %c0_i32, %c0_i32_0 : i32, i32
  }
  func.func @transform_3(%arg0: i32, %arg1: i32) -> (i32, i32) {
    %c0_i32 = arith.constant 0 : i32
    %c0_i32_0 = arith.constant 0 : i32
    %c0_i32_1 = arith.constant 0 : i32
    return %c0_i32, %c0_i32_0 : i32, i32
  }
  func.func @transform_4(%arg0: i32, %arg1: i32) -> (i32, i32) {
    %c0_i32 = arith.constant 0 : i32
    %c0_i32_0 = arith.constant 0 : i32
    %c0_i32_1 = arith.constant 0 : i32
    return %c0_i32, %c0_i32_0 : i32, i32
  }
  func.func @transform_5(%arg0: i32, %arg1: i32) -> (i32, i32) {
    %c0_i32 = arith.constant 0 : i32
    %c0_i32_0 = arith.constant 0 : i32
    %c0_i32_1 = arith.constant 0 : i32
    return %c0_i32, %c0_i32_0 : i32, i32
  }
  func.func @transform_6(%arg0: i32, %arg1: i32) -> (i32, i32) {
    %c0_i32 = arith.constant 0 : i32
    %c0_i32_0 = arith.constant 0 : i32
    %c0_i32_1 = arith.constant 0 : i32
    return %c0_i32, %c0_i32_0 : i32, i32
  }
  func.func @transform_7(%arg0: i32, %arg1: i32) -> (i32, i32) {
    %c0_i32 = arith.constant 0 : i32
    %c0_i32_0 = arith.constant 0 : i32
    %c0_i32_1 = arith.constant 0 : i32
    return %c0_i32, %c0_i32_0 : i32, i32
  }
  func.func @transform_8(%arg0: i32, %arg1: i32) -> (i32, i32) {
    %c0_i32 = arith.constant 0 : i32
    %c0_i32_0 = arith.constant 0 : i32
    %c0_i32_1 = arith.constant 0 : i32
    return %c0_i32, %c0_i32_0 : i32, i32
  }
  func.func @transform_9(%arg0: i32, %arg1: i32) -> (i32, i32) {
    %c0_i32 = arith.constant 0 : i32
    %c0_i32_0 = arith.constant 0 : i32
    %c0_i32_1 = arith.constant 0 : i32
    return %c0_i32, %c0_i32_0 : i32, i32
  }
  func.func @transform_10(%arg0: i32, %arg1: i32) -> (i32, i32) {
    %c0_i32 = arith.constant 0 : i32
    %c0_i32_0 = arith.constant 0 : i32
    %c0_i32_1 = arith.constant 0 : i32
    return %c0_i32, %c0_i32_0 : i32, i32
  }
  func.func @transform_11(%arg0: i32, %arg1: i32) -> (i32, i32, i32, i32) {
    %c0_i32 = arith.constant 0 : i32
    %c0_i32_0 = arith.constant 0 : i32
    %c0_i32_1 = arith.constant 0 : i32
    return %arg0, %arg1, %c0_i32, %c0_i32_0 : i32, i32, i32, i32
  }
}

</mosaic_0001>

<llo_original>
// kernel: tpu_custom_call.1
$region0: #{tpu_custom_call.1}
  #allocation0 [shape = 'u32[]', space=smem, size = 0x4, offset = 0x4, fixed_abs, tag = 'smem constant byte address 0x4 - core index']
  #allocation1 [shape = 'u32[144,128]{1,0:T(1,128)}', space=vmem, size = 0x12000, scoped, tag = 'internal scratch']
  %s0 = inlined_call_operand.vmem [shape: bf16[2,2,10,16,4], index: 0, kind: input, shape index: {}]
  %s1 = inlined_call_operand.vmem [shape: bf16[4,8], index: 1, kind: input, shape index: {}]
  %s2 = inlined_call_operand.vmem [shape: f32[1,8], index: 2, kind: input, shape index: {}]
  %s3 = inlined_call_operand.vmem [shape: bf16[8,8], index: 3, kind: input, shape index: {}]
  %s4 = inlined_call_operand.vmem [shape: f32[1,8], index: 4, kind: input, shape index: {}]
  %s5 = inlined_call_operand.vmem [shape: bf16[72,8], index: 5, kind: input, shape index: {}]
  %s6 = inlined_call_operand.vmem [shape: f32[1,8], index: 6, kind: input, shape index: {}]
  %s7 = inlined_call_operand.vmem [shape: f32[1,8], index: 7, kind: input, shape index: {}]
  %s8 = inlined_call_operand.vmem [shape: f32[1,8], index: 8, kind: input, shape index: {}]
  %s9 = inlined_call_operand.vmem [shape: f32[1,8], index: 9, kind: input, shape index: {}]
  %s10 = inlined_call_operand.vmem [shape: f32[1,8], index: 10, kind: input, shape index: {}]
  %s11 = inlined_call_operand.hbm [shape: f32[2,16,16,16], index: 11, kind: output, shape index: {}]
  %s12 = sld [smem:[#allocation0]]
  $region77: #{tpu_custom_call.1} parent=0
    _
  %s14 = ssub.s32 1, %s12
  %s15 = scalar_select 0, %s14, %s12
  $region1: #{tpu_custom_call.1} parent=0
    #allocation2 [shape = 'u8[131072]{0}', space=vmem, size = 0x20000, scoped, tag = 'output window, operand 0']
    #allocation3 [shape = 's32[2]{0}', space=sflag, size = 0x8, scoped, tag = 'scoped memory for tpu_custom_call.1']
    %16 = vsyncpa [#allocation3], 0
    %s17 = scalar_lea.sflag [#allocation3], 1
    %18 = vsyncpa %s17, 0
    loop: start=0, step=1, limit=6
    $region2: #{tpu_custom_call.1} parent=1 // loop_pre_header
      _
    $region3: #{tpu_custom_call.1} parent=1 // loop_header
      %s20 = sphi 0, %s24
      %p21 = scmp.ge.s32.totalorder %s20, 6
      %s27 = sphi 0, %s39
      %s28 = sphi 0, %s35
      %s29 = sphi 0, %s27
      %s30 = sphi 0, %s28
      %s31 = sphi 0, %s29
      %s32 = sphi 0, %s30
      %s44 = sphi 0, %s46
      %s47 = sphi 0, %s44
      %s48 = sphi 0, %s47
      %s64 = sphi 0, %s48
      %s68 = sphi 0, %s68
      %s70 = sphi 0, %s68
      %s71 = sphi 0, %s70
      %s85 = sphi 0, %s71
      %s89 = sphi 0, %s89
      %s91 = sphi 0, %s89
      %s92 = sphi 0, %s91
      %s106 = sphi 0, %s92
      %s110 = sphi 0, %s110
      %s112 = sphi 0, %s110
      %s113 = sphi 0, %s112
      %s127 = sphi 0, %s113
      %s131 = sphi 0, %s131
      %s133 = sphi 0, %s131
      %s134 = sphi 0, %s133
      %s148 = sphi 0, %s134
      %s152 = sphi 0, %s152
      %s154 = sphi 0, %s152
      %s155 = sphi 0, %s154
      %s169 = sphi 0, %s155
      %s173 = sphi 0, %s173
      %s175 = sphi 0, %s173
      %s176 = sphi 0, %s175
      %s190 = sphi 0, %s176
      %s194 = sphi 0, %s194
      %s196 = sphi 0, %s194
      %s197 = sphi 0, %s196
      %s211 = sphi 0, %s197
      %s215 = sphi 0, %s215
      %s217 = sphi 0, %s215
      %s218 = sphi 0, %s217
      %s232 = sphi 0, %s218
      %s236 = sphi 0, %s236
      %s238 = sphi 0, %s236
      %s239 = sphi 0, %s238
      %s253 = sphi 0, %s239
      %s257 = sphi 0, %s257
      %s259 = sphi 0, %s257
      %s260 = sphi 0, %s259
      %s274 = sphi 0, %s260
      %s282 = sphi 0, %s284
      %s285 = sphi 0, %s282
      %s286 = sphi 0, %s285
      %s302 = sphi 0, %s286
    $region4: #{tpu_custom_call.1} parent=1 // loop_header_branch
      %23 = sbr.rel (%p21) target = $region8
    $region5: #{tpu_custom_call.1} parent=1 // loop_body
      %s25 = ssub.s32 %s20, 1
      %s26 = ssub.s32 %s20, 2
      %s33 = sadd.s32 1, %s28
      %p34 = scmp.ge.s32.totalorder %s33, 2
      %s35 = scalar_select %p34, 0, %s33
      %s36 = sadd.s32 1, %s27
      %s37 = scalar_select %p34, %s36, %s27
      %p38 = scmp.ge.s32.totalorder %s37, 2
      %s39 = scalar_select %p38, 0, %s37
      %s40 = ssub.s32 %s27, %s39
      %s41 = ssub.s32 %s28, %s35
      %s42 = sor.u32 %s40, %s41
      %p43 = scmp.eq.s32.totalorder %s42, 0
      %s45 = sadd.s32 %s44, 1
      %s46 = scalar_select %p43, %s44, %s45
      %p49 = pneg %p43
      %p50 = scmp.eq.s32.totalorder %s20, 3
      %p51 = por %p49, %p50
      %p52 = scmp.ne.s32.totalorder %s44, %s47
      %p53 = scmp.eq.s32.totalorder %s20, 0
      %p54 = por %p52, %p53
      %p55 = scmp.ne.s32.totalorder %s44, %s47
      %p56 = scmp.eq.s32.totalorder %s25, 3
      %p57 = por %p55, %p56
      %p58 = scmp.ne.s32.totalorder %s47, %s48
      %p59 = scmp.eq.s32.totalorder %s25, 0
      %p60 = por %p58, %p59
      %p61 = scmp.ne.s32.totalorder %s47, %s48
      %p62 = scmp.eq.s32.totalorder %s26, 3
      %p63 = por %p61, %p62
      %p65 = scmp.ne.s32.totalorder %s48, %s64
      %p66 = scmp.eq.s32.totalorder %s26, 0
      %p67 = por %p65, %p66
      %s69 = sadd.s32 %s68, 1
      %p72 = scmp.eq.s32.totalorder %s20, 3
      %p73 = scmp.ne.s32.totalorder %s68, %s70
      %p74 = scmp.eq.s32.totalorder %s20, 0
      %p75 = por %p73, %p74
      %p76 = scmp.ne.s32.totalorder %s68, %s70
      %p77 = scmp.eq.s32.totalorder %s25, 3
      %p78 = por %p76, %p77
      %p79 = scmp.ne.s32.totalorder %s70, %s71
      %p80 = scmp.eq.s32.totalorder %s25, 0
      %p81 = por %p79, %p80
      %p82 = scmp.ne.s32.totalorder %s70, %s71
      %p83 = scmp.eq.s32.totalorder %s26, 3
      %p84 = por %p82, %p83
      %p86 = scmp.ne.s32.totalorder %s71, %s85
      %p87 = scmp.eq.s32.totalorder %s26, 0
      %p88 = por %p86, %p87
      %s90 = sadd.s32 %s89, 1
      %p93 = scmp.eq.s32.totalorder %s20, 3
      %p94 = scmp.ne.s32.totalorder %s89, %s91
      %p95 = scmp.eq.s32.totalorder %s20, 0
      %p96 = por %p94, %p95
      %p97 = scmp.ne.s32.totalorder %s89, %s91
      %p98 = scmp.eq.s32.totalorder %s25, 3
      %p99 = por %p97, %p98
      %p100 = scmp.ne.s32.totalorder %s91, %s92
      %p101 = scmp.eq.s32.totalorder %s25, 0
      %p102 = por %p100, %p101
      %p103 = scmp.ne.s32.totalorder %s91, %s92
      %p104 = scmp.eq.s32.totalorder %s26, 3
      %p105 = por %p103, %p104
      %p107 = scmp.ne.s32.totalorder %s92, %s106
      %p108 = scmp.eq.s32.totalorder %s26, 0
      %p109 = por %p107, %p108
      %s111 = sadd.s32 %s110, 1
      %p114 = scmp.eq.s32.totalorder %s20, 3
      %p115 = scmp.ne.s32.totalorder %s110, %s112
      %p116 = scmp.eq.s32.totalorder %s20, 0
      %p117 = por %p115, %p116
      %p118 = scmp.ne.s32.totalorder %s110, %s112
      %p119 = scmp.eq.s32.totalorder %s25, 3
      %p120 = por %p118, %p119
      %p121 = scmp.ne.s32.totalorder %s112, %s113
      %p122 = scmp.eq.s32.totalorder %s25, 0
      %p123 = por %p121, %p122
      %p124 = scmp.ne.s32.totalorder %s112, %s113
      %p125 = scmp.eq.s32.totalorder %s26, 3
      %p126 = por %p124, %p125
      %p128 = scmp.ne.s32.totalorder %s113, %s127
      %p129 = scmp.eq.s32.totalorder %s26, 0
      %p130 = por %p128, %p129
      %s132 = sadd.s32 %s131, 1
      %p135 = scmp.eq.s32.totalorder %s20, 3
      %p136 = scmp.ne.s32.totalorder %s131, %s133
      %p137 = scmp.eq.s32.totalorder %s20, 0
      %p138 = por %p136, %p137
      %p139 = scmp.ne.s32.totalorder %s131, %s133
      %p140 = scmp.eq.s32.totalorder %s25, 3
      %p141 = por %p139, %p140
      %p142 = scmp.ne.s32.totalorder %s133, %s134
      %p143 = scmp.eq.s32.totalorder %s25, 0
      %p144 = por %p142, %p143
      %p145 = scmp.ne.s32.totalorder %s133, %s134
      %p146 = scmp.eq.s32.totalorder %s26, 3
      %p147 = por %p145, %p146
      %p149 = scmp.ne.s32.totalorder %s134, %s148
      %p150 = scmp.eq.s32.totalorder %s26, 0
      %p151 = por %p149, %p150
      %s153 = sadd.s32 %s152, 1
      %p156 = scmp.eq.s32.totalorder %s20, 3
      %p157 = scmp.ne.s32.totalorder %s152, %s154
      %p158 = scmp.eq.s32.totalorder %s20, 0
      %p159 = por %p157, %p158
      %p160 = scmp.ne.s32.totalorder %s152, %s154
      %p161 = scmp.eq.s32.totalorder %s25, 3
      %p162 = por %p160, %p161
      %p163 = scmp.ne.s32.totalorder %s154, %s155
      %p164 = scmp.eq.s32.totalorder %s25, 0
      %p165 = por %p163, %p164
      %p166 = scmp.ne.s32.totalorder %s154, %s155
      %p167 = scmp.eq.s32.totalorder %s26, 3
      %p168 = por %p166, %p167
      %p170 = scmp.ne.s32.totalorder %s155, %s169
      %p171 = scmp.eq.s32.totalorder %s26, 0
      %p172 = por %p170, %p171
      %s174 = sadd.s32 %s173, 1
      %p177 = scmp.eq.s32.totalorder %s20, 3
      %p178 = scmp.ne.s32.totalorder %s173, %s175
      %p179 = scmp.eq.s32.totalorder %s20, 0
      %p180 = por %p178, %p179
      %p181 = scmp.ne.s32.totalorder %s173, %s175
      %p182 = scmp.eq.s32.totalorder %s25, 3
      %p183 = por %p181, %p182
      %p184 = scmp.ne.s32.totalorder %s175, %s176
      %p185 = scmp.eq.s32.totalorder %s25, 0
      %p186 = por %p184, %p185
      %p187 = scmp.ne.s32.totalorder %s175, %s176
      %p188 = scmp.eq.s32.totalorder %s26, 3
      %p189 = por %p187, %p188
      %p191 = scmp.ne.s32.totalorder %s176, %s190
      %p192 = scmp.eq.s32.totalorder %s26, 0
      %p193 = por %p191, %p192
      %s195 = sadd.s32 %s194, 1
      %p198 = scmp.eq.s32.totalorder %s20, 3
      %p199 = scmp.ne.s32.totalorder %s194, %s196
      %p200 = scmp.eq.s32.totalorder %s20, 0
      %p201 = por %p199, %p200
      %p202 = scmp.ne.s32.totalorder %s194, %s196
      %p203 = scmp.eq.s32.totalorder %s25, 3
      %p204 = por %p202, %p203
      %p205 = scmp.ne.s32.totalorder %s196, %s197
      %p206 = scmp.eq.s32.totalorder %s25, 0
      %p207 = por %p205, %p206
      %p208 = scmp.ne.s32.totalorder %s196, %s197
      %p209 = scmp.eq.s32.totalorder %s26, 3
      %p210 = por %p208, %p209
      %p212 = scmp.ne.s32.totalorder %s197, %s211
      %p213 = scmp.eq.s32.totalorder %s26, 0
      %p214 = por %p212, %p213
      %s216 = sadd.s32 %s215, 1
      %p219 = scmp.eq.s32.totalorder %s20, 3
      %p220 = scmp.ne.s32.totalorder %s215, %s217
      %p221 = scmp.eq.s32.totalorder %s20, 0
      %p222 = por %p220, %p221
      %p223 = scmp.ne.s32.totalorder %s215, %s217
      %p224 = scmp.eq.s32.totalorder %s25, 3
      %p225 = por %p223, %p224
      %p226 = scmp.ne.s32.totalorder %s217, %s218
      %p227 = scmp.eq.s32.totalorder %s25, 0
      %p228 = por %p226, %p227
      %p229 = scmp.ne.s32.totalorder %s217, %s218
      %p230 = scmp.eq.s32.totalorder %s26, 3
      %p231 = por %p229, %p230
      %p233 = scmp.ne.s32.totalorder %s218, %s232
      %p234 = scmp.eq.s32.totalorder %s26, 0
      %p235 = por %p233, %p234
      %s237 = sadd.s32 %s236, 1
      %p240 = scmp.eq.s32.totalorder %s20, 3
      %p241 = scmp.ne.s32.totalorder %s236, %s238
      %p242 = scmp.eq.s32.totalorder %s20, 0
      %p243 = por %p241, %p242
      %p244 = scmp.ne.s32.totalorder %s236, %s238
      %p245 = scmp.eq.s32.totalorder %s25, 3
      %p246 = por %p244, %p245
      %p247 = scmp.ne.s32.totalorder %s238, %s239
      %p248 = scmp.eq.s32.totalorder %s25, 0
      %p249 = por %p247, %p248
      %p250 = scmp.ne.s32.totalorder %s238, %s239
      %p251 = scmp.eq.s32.totalorder %s26, 3
      %p252 = por %p250, %p251
      %p254 = scmp.ne.s32.totalorder %s239, %s253
      %p255 = scmp.eq.s32.totalorder %s26, 0
      %p256 = por %p254, %p255
      %s258 = sadd.s32 %s257, 1
      %p261 = scmp.eq.s32.totalorder %s20, 3
      %p262 = scmp.ne.s32.totalorder %s257, %s259
      %p263 = scmp.eq.s32.totalorder %s20, 0
      %p264 = por %p262, %p263
      %p265 = scmp.ne.s32.totalorder %s257, %s259
      %p266 = scmp.eq.s32.totalorder %s25, 3
      %p267 = por %p265, %p266
      %p268 = scmp.ne.s32.totalorder %s259, %s260
      %p269 = scmp.eq.s32.totalorder %s25, 0
      %p270 = por %p268, %p269
      %p271 = scmp.ne.s32.totalorder %s259, %s260
      %p272 = scmp.eq.s32.totalorder %s26, 3
      %p273 = por %p271, %p272
      %p275 = scmp.ne.s32.totalorder %s260, %s274
      %p276 = scmp.eq.s32.totalorder %s26, 0
      %p277 = por %p275, %p276
      %s278 = ssub.s32 %s27, %s39
      %s279 = ssub.s32 %s28, %s35
      %s280 = sor.u32 %s278, %s279
      %p281 = scmp.eq.s32.totalorder %s280, 0
      %s283 = sadd.s32 %s282, 1
      %s284 = scalar_select %p281, %s282, %s283
      %p287 = pneg %p281
      %p288 = scmp.eq.s32.totalorder %s20, 3
      %p289 = por %p287, %p288
      %p290 = scmp.ne.s32.totalorder %s282, %s285
      %p291 = scmp.eq.s32.totalorder %s20, 0
      %p292 = por %p290, %p291
      %p293 = scmp.ne.s32.totalorder %s282, %s285
      %p294 = scmp.eq.s32.totalorder %s25, 3
      %p295 = por %p293, %p294
      %p296 = scmp.ne.s32.totalorder %s285, %s286
      %p297 = scmp.eq.s32.totalorder %s25, 0
      %p298 = por %p296, %p297
      %p299 = scmp.ne.s32.totalorder %s285, %s286
      %p300 = scmp.eq.s32.totalorder %s26, 3
      %p301 = por %p299, %p300
      %p303 = scmp.ne.s32.totalorder %s286, %s302
      %p304 = scmp.eq.s32.totalorder %s26, 0
      %p305 = por %p303, %p304
      %p306 = scmp.le.s32.totalorder 1, %s20
      %p307 = scmp.lt.s32.totalorder %s20, 5
      %p308 = pnand %p306, %p307
      %p309 = pneg %p308
      // Predicated region
      $region9: #{tpu_custom_call.1} parent=5 // pred_check
        _
      $region10: #{tpu_custom_call.1} parent=5 // pred_check_branch
        %311 = sbr.rel (%p308) target = $region12
      $region11: #{tpu_custom_call.1} parent=5 // pred_region
        %s312 = ssub.s32 %s20, 1
        // Predicated region
        $region13: #{tpu_custom_call.1} parent=11 // pred_check
          %p313 = pneg %p81
        $region14: #{tpu_custom_call.1} parent=11 // pred_check_branch
          %315 = sbr.rel (%p313) target = $region16
        $region15: #{tpu_custom_call.1} parent=11 // pred_region
          _
        $region16: #{tpu_custom_call.1} parent=11 // pred_fallthru
          _
        // Predicated region
        $region17: #{tpu_custom_call.1} parent=11 // pred_check
          %p316 = pneg %p102
        $region18: #{tpu_custom_call.1} parent=11 // pred_check_branch
          %318 = sbr.rel (%p316) target = $region20
        $region19: #{tpu_custom_call.1} parent=11 // pred_region
          _
        $region20: #{tpu_custom_call.1} parent=11 // pred_fallthru
          _
        // Predicated region
        $region21: #{tpu_custom_call.1} parent=11 // pred_check
          %p319 = pneg %p123
        $region22: #{tpu_custom_call.1} parent=11 // pred_check_branch
          %321 = sbr.rel (%p319) target = $region24
        $region23: #{tpu_custom_call.1} parent=11 // pred_region
          _
        $region24: #{tpu_custom_call.1} parent=11 // pred_fallthru
          _
        // Predicated region
        $region25: #{tpu_custom_call.1} parent=11 // pred_check
          %p322 = pneg %p144
        $region26: #{tpu_custom_call.1} parent=11 // pred_check_branch
          %324 = sbr.rel (%p322) target = $region28
        $region27: #{tpu_custom_call.1} parent=11 // pred_region
          _
        $region28: #{tpu_custom_call.1} parent=11 // pred_fallthru
          _
        // Predicated region
        $region29: #{tpu_custom_call.1} parent=11 // pred_check
          %p325 = pneg %p165
        $region30: #{tpu_custom_call.1} parent=11 // pred_check_branch
          %327 = sbr.rel (%p325) target = $region32
        $region31: #{tpu_custom_call.1} parent=11 // pred_region
          _
        $region32: #{tpu_custom_call.1} parent=11 // pred_fallthru
          _
        // Predicated region
        $region33: #{tpu_custom_call.1} parent=11 // pred_check
          %p328 = pneg %p186
        $region34: #{tpu_custom_call.1} parent=11 // pred_check_branch
          %330 = sbr.rel (%p328) target = $region36
        $region35: #{tpu_custom_call.1} parent=11 // pred_region
          _
        $region36: #{tpu_custom_call.1} parent=11 // pred_fallthru
          _
        // Predicated region
        $region37: #{tpu_custom_call.1} parent=11 // pred_check
          %p331 = pneg %p207
        $region38: #{tpu_custom_call.1} parent=11 // pred_check_branch
          %333 = sbr.rel (%p331) target = $region40
        $region39: #{tpu_custom_call.1} parent=11 // pred_region
          _
        $region40: #{tpu_custom_call.1} parent=11 // pred_fallthru
          _
        // Predicated region
        $region41: #{tpu_custom_call.1} parent=11 // pred_check
          %p334 = pneg %p228
        $region42: #{tpu_custom_call.1} parent=11 // pred_check_branch
          %336 = sbr.rel (%p334) target = $region44
        $region43: #{tpu_custom_call.1} parent=11 // pred_region
          _
        $region44: #{tpu_custom_call.1} parent=11 // pred_fallthru
          _
        // Predicated region
        $region45: #{tpu_custom_call.1} parent=11 // pred_check
          %p337 = pneg %p249
        $region46: #{tpu_custom_call.1} parent=11 // pred_check_branch
          %339 = sbr.rel (%p337) target = $region48
        $region47: #{tpu_custom_call.1} parent=11 // pred_region
          _
        $region48: #{tpu_custom_call.1} parent=11 // pred_fallthru
          _
        // Predicated region
        $region49: #{tpu_custom_call.1} parent=11 // pred_check
          %p340 = pneg %p270
        $region50: #{tpu_custom_call.1} parent=11 // pred_check_branch
          %342 = sbr.rel (%p340) target = $region52
        $region51: #{tpu_custom_call.1} parent=11 // pred_region
          _
        $region52: #{tpu_custom_call.1} parent=11 // pred_fallthru
          _
      $region12: #{tpu_custom_call.1} parent=5 // pred_fallthru
        _
      %p343 = scmp.lt.s32.totalorder %s20, 4
      // Predicated region
      $region53: #{tpu_custom_call.1} parent=5 // pred_check
        %p344 = pneg %p343
      $region54: #{tpu_custom_call.1} parent=5 // pred_check_branch
        %346 = sbr.rel (%p344) target = $region56
      $region55: #{tpu_custom_call.1} parent=5 // pred_region
        // Predicated region
        $region57: #{tpu_custom_call.1} parent=55 // pred_check
          %p347 = pneg %p54
        $region58: #{tpu_custom_call.1} parent=55 // pred_check_branch
          %349 = sbr.rel (%p347) target = $region60
        $region59: #{tpu_custom_call.1} parent=55 // pred_region
          %p350 = scmp.lt.s32.totalorder %s27, 1
          %s351 = scalar_select %p350, %s27, 1
          %p352 = scmp.lt.s32.totalorder %s28, 1
          %s353 = scalar_select %p352, %s28, 1
          %s354 = smul.addr %s353, 20
          %s355 = smul.addr %s351, 40
          %s356 = sadd.s32 %s354, %s355
          %s357 = smul.addr %s356, 4
          %s358 = scalar_lea.vmem %s0, %s357
        $region60: #{tpu_custom_call.1} parent=55 // pred_fallthru
          _
      $region56: #{tpu_custom_call.1} parent=5 // pred_fallthru
        _
      %p359 = scmp.le.s32.totalorder 1, %s20
      %p360 = scmp.lt.s32.totalorder %s20, 5
      %p361 = pnand %p359, %p360
      %p362 = pneg %p361
      // Predicated region
      $region61: #{tpu_custom_call.1} parent=5 // pred_check
        _
      $region62: #{tpu_custom_call.1} parent=5 // pred_check_branch
        %364 = sbr.rel (%p361) target = $region64
      $region63: #{tpu_custom_call.1} parent=5 // pred_region
        %s365 = ssub.s32 %s20, 1
        %p366 = scmp.lt.s32.totalorder %s29, 1
        %s367 = scalar_select %p366, %s29, 1
        %p368 = scmp.lt.s32.totalorder %s30, 1
        %s369 = scalar_select %p368, %s30, 1
        %s370 = smul.addr %s369, 20
        %s371 = smul.addr %s367, 40
        %s372 = sadd.s32 %s370, %s371
        %s373 = smul.addr %s372, 4
        %s374 = scalar_lea.vmem %s0, %s373
        %p375 = pneg %p60
        %p376 = pneg %p57
        %p377 = pneg %p81
        %p378 = pneg %p78
        %p379 = pneg %p102
        %p380 = pneg %p99
        %p381 = pneg %p123
        %p382 = pneg %p120
        %p383 = pneg %p144
        %p384 = pneg %p141
        %p385 = pneg %p165
        %p386 = pneg %p162
        %p387 = pneg %p186
        %p388 = pneg %p183
        %p389 = pneg %p207
        %p390 = pneg %p204
        %p391 = pneg %p228
        %p392 = pneg %p225
        %p393 = pneg %p249
        %p394 = pneg %p246
        %p395 = pneg %p270
        %p396 = pneg %p267
        %p397 = pneg %p298
        %p398 = pneg %p295
        %s399 = sand.u32 %s285, 1
        %s400 = scalar_lea.sflag [#allocation3], %s399
        %s401 = sand.u32 %s285, 1
        %s402 = smul.addr %s401, 128
        %s403 = scalar_lea.vmem [#allocation2], %s402
        %p404 = scmp.lt.s32.totalorder %s29, 1
        %s405 = scalar_select %p404, %s29, 1
        %p406 = scmp.lt.s32.totalorder %s30, 1
        %s407 = scalar_select %p406, %s30, 1
        %s408 = smul.addr %s407, 20
        %s409 = smul.addr %s405, 40
        %s410 = sadd.s32 %s408, %s409
        %s411 = smul.addr %s410, 4
        %s412 = scalar_lea.vmem %s0, %s411
        %s413 = smul.u32 8, %s30
        %v415 = vld [vmem:[%s412] sm:$0xf]
        %v416 = vld [vmem:[%s412 + $0x4] sm:$0xf]
        %v417 = vld [vmem:[%s412 + $0x8] sm:$0xf]
        %v418 = vld [vmem:[%s412 + $0xc] sm:$0xf]
        %v419 = vld [vmem:[%s412 + $0x10] sm:$0xf]
        %v420 = vld [vmem:[%s412 + $0x14] sm:$0xf]
        %v421 = vld [vmem:[%s412 + $0x18] sm:$0xf]
        %v422 = vld [vmem:[%s412 + $0x1c] sm:$0xf]
        %v423 = vld [vmem:[%s412 + $0x20] sm:$0xf]
        %v424 = vld [vmem:[%s412 + $0x24] sm:$0xf]
        %v425 = vld [vmem:[%s412 + $0x28] sm:$0xf]
        %v426 = vld [vmem:[%s412 + $0x2c] sm:$0xf]
        %v427 = vld [vmem:[%s412 + $0x30] sm:$0xf]
        %v428 = vld [vmem:[%s412 + $0x34] sm:$0xf]
        %v429 = vld [vmem:[%s412 + $0x38] sm:$0xf]
        %v430 = vld [vmem:[%s412 + $0x3c] sm:$0xf]
        %v431 = vld [vmem:[%s412 + $0x40] sm:$0xf]
        %v432 = vld [vmem:[%s412 + $0x44] sm:$0xf]
        %v433 = vld [vmem:[%s412 + $0x48] sm:$0xf]
        %v434 = vld [vmem:[%s412 + $0x4c] sm:$0xf]
        %v435 = vld [vmem:[%s1] sm:$0x3]
        %v436 = vld [vmem:[%s2] sm:$0x1]
        %v438 = vlaneseq
        %v439 = vshrl.u32 %v438, 7
        %v440 = vsub.s32 0, %v439
        %v441 = vrot.slane %v436, %v440
        %v463 = vunpack.c.l.b16 %v415
        %v464 = vunpack.c.l.b16 %v416
        %v465 = vunpack.c.l.b16 %v417
        %v466 = vunpack.c.l.b16 %v418
        %v467 = vunpack.c.l.b16 %v419
        %v468 = vunpack.c.l.b16 %v420
        %v469 = vunpack.c.l.b16 %v421
        %v470 = vunpack.c.l.b16 %v422
        %v471 = vunpack.c.l.b16 %v423
        %v472 = vunpack.c.l.b16 %v424
        %v473 = vunpack.c.l.b16 %v425
        %v474 = vunpack.c.l.b16 %v426
        %v475 = vunpack.c.l.b16 %v427
        %v476 = vunpack.c.l.b16 %v428
        %v477 = vunpack.c.l.b16 %v429
        %v478 = vunpack.c.l.b16 %v430
        %v479 = vunpack.c.l.b16 %v431
        %v480 = vunpack.c.l.b16 %v432
        %v481 = vunpack.c.l.b16 %v433
        %v482 = vunpack.c.l.b16 %v434
        %v483 = vpack.c.b16 %v464, %v463
        %v484 = vpack.c.b16 %v466, %v465
        %v485 = vpack.c.b16 %v468, %v467
        %v486 = vpack.c.b16 %v470, %v469
        %v487 = vpack.c.b16 %v472, %v471
        %v488 = vpack.c.b16 %v474, %v473
        %v489 = vpack.c.b16 %v476, %v475
        %v490 = vpack.c.b16 %v478, %v477
        %v491 = vpack.c.b16 %v480, %v479
        %v492 = vpack.c.b16 %v482, %v481
        %vm493 = vcmask 31744
        %v495 = vsel %vm493, %v483, 0
        %v498 = vsel %vm493, %v484, 0
        %v501 = vsel %vm493, %v485, 0
        %v504 = vsel %vm493, %v486, 0
        %v507 = vsel %vm493, %v487, 0
        %v510 = vsel %vm493, %v488, 0
        %v513 = vsel %vm493, %v489, 0
        %v516 = vsel %vm493, %v490, 0
        %v519 = vsel %vm493, %v491, 0
        %v522 = vsel %vm493, %v492, 0
        %vm524 = vcmask 1041408
        %v526 = vsel %vm524, %v435, 0
        %528 = vmatprep.subr.bf16.mxu0 0
        %529 = vmatpush1.bf16.msra.mxu0 %v526
        %530 = vmatprep.subr.bf16.mxu0 0
        %531 = vmatpush1.bf16.msra.mxu0 0
        %532 = vmatprep.subr.bf16.mxu0 0
        %533 = vmatpush1.bf16.msra.mxu0 0
        %534 = vmatprep.subr.bf16.mxu0 0
        %535 = vmatpush1.bf16.msra.mxu0 0
        %536 = vmatprep.subr.bf16.mxu0 0
        %537 = vmatpush1.bf16.msra.mxu0 0
        %538 = vmatprep.subr.bf16.mxu0 0
        %539 = vmatpush1.bf16.msra.mxu0 0
        %540 = vmatprep.subr.bf16.mxu0 0
        %541 = vmatpush1.bf16.msra.mxu0 0
        %542 = vmatprep.subr.bf16.mxu0 0
        %543 = vmatpush1.bf16.msra.mxu0 0
        %544 = vmatprep.subr.bf16.mxu0 0
        %545 = vmatpush1.bf16.msra.mxu0 0
        %546 = vmatprep.subr.bf16.mxu0 0
        %547 = vmatpush1.bf16.msra.mxu0 0
        %548 = vmatprep.subr.bf16.mxu0 0
        %549 = vmatpush1.bf16.msra.mxu0 0
        %550 = vmatprep.subr.bf16.mxu0 0
        %551 = vmatpush1.bf16.msra.mxu0 0
        %552 = vmatprep.subr.bf16.mxu0 0
        %553 = vmatpush1.bf16.msra.mxu0 0
        %554 = vmatprep.subr.bf16.mxu0 0
        %555 = vmatpush1.bf16.msra.mxu0 0
        %556 = vmatprep.subr.bf16.mxu0 0
        %557 = vmatpush1.bf16.msra.mxu0 0
        %558 = vmatprep.subr.bf16.mxu0 0
        %559 = vmatpush1.bf16.msra.mxu0 0
        %560 = vmatprep.mubr.bf16.mxu0 0
        %561 = vmatmul.mubr.bf16.gmra.mrb[0].mxu0 %v495
        %v562 = vpop.f32.mrb[0].mxu0
        %v563 = vadd.f32 %v441, %v562
        %v564 = vpop.f32.mrb[0].mxu0
        %v565 = vpop.f32.mrb[0].mxu0
        %v566 = vadd.f32 %v441, %v565
        %v567 = vpop.f32.mrb[0].mxu0
        %568 = vmatprep.mubr.bf16.mxu0 0
        %569 = vmatmul.mubr.bf16.gmra.mrb[0].mxu0 %v498
        %v570 = vpop.f32.mrb[0].mxu0
        %v571 = vadd.f32 %v441, %v570
        %v572 = vpop.f32.mrb[0].mxu0
        %v573 = vpop.f32.mrb[0].mxu0
        %v574 = vadd.f32 %v441, %v573
        %v575 = vpop.f32.mrb[0].mxu0
        %576 = vmatprep.mubr.bf16.mxu0 0
        %577 = vmatmul.mubr.bf16.gmra.mrb[0].mxu0 %v501
        %v578 = vpop.f32.mrb[0].mxu0
        %v579 = vadd.f32 %v441, %v578
        %v580 = vpop.f32.mrb[0].mxu0
        %v581 = vpop.f32.mrb[0].mxu0
        %v582 = vadd.f32 %v441, %v581
        %v583 = vpop.f32.mrb[0].mxu0
        %584 = vmatprep.mubr.bf16.mxu0 0
        %585 = vmatmul.mubr.bf16.gmra.mrb[0].mxu0 %v504
        %v586 = vpop.f32.mrb[0].mxu0
        %v587 = vadd.f32 %v441, %v586
        %v588 = vpop.f32.mrb[0].mxu0
        %v589 = vpop.f32.mrb[0].mxu0
        %v590 = vadd.f32 %v441, %v589
        %v591 = vpop.f32.mrb[0].mxu0
        %592 = vmatprep.mubr.bf16.mxu0 0
        %593 = vmatmul.mubr.bf16.gmra.mrb[0].mxu0 %v507
        %v594 = vpop.f32.mrb[0].mxu0
        %v595 = vadd.f32 %v441, %v594
        %v596 = vpop.f32.mrb[0].mxu0
        %v597 = vpop.f32.mrb[0].mxu0
        %v598 = vadd.f32 %v441, %v597
        %v599 = vpop.f32.mrb[0].mxu0
        %600 = vmatprep.mubr.bf16.mxu0 0
        %601 = vmatmul.mubr.bf16.gmra.mrb[0].mxu0 %v510
        %v602 = vpop.f32.mrb[0].mxu0
        %v603 = vadd.f32 %v441, %v602
        %v604 = vpop.f32.mrb[0].mxu0
        %v605 = vpop.f32.mrb[0].mxu0
        %v606 = vadd.f32 %v441, %v605
        %v607 = vpop.f32.mrb[0].mxu0
        %608 = vmatprep.mubr.bf16.mxu0 0
        %609 = vmatmul.mubr.bf16.gmra.mrb[0].mxu0 %v513
        %v610 = vpop.f32.mrb[0].mxu0
        %v611 = vadd.f32 %v441, %v610
        %v612 = vpop.f32.mrb[0].mxu0
        %v613 = vpop.f32.mrb[0].mxu0
        %v614 = vadd.f32 %v441, %v613
        %v615 = vpop.f32.mrb[0].mxu0
        %616 = vmatprep.mubr.bf16.mxu0 0
        %617 = vmatmul.mubr.bf16.gmra.mrb[0].mxu0 %v516
        %v618 = vpop.f32.mrb[0].mxu0
        %v619 = vadd.f32 %v441, %v618
        %v620 = vpop.f32.mrb[0].mxu0
        %v621 = vpop.f32.mrb[0].mxu0
        %v622 = vadd.f32 %v441, %v621
        %v623 = vpop.f32.mrb[0].mxu0
        %624 = vmatprep.mubr.bf16.mxu0 0
        %625 = vmatmul.mubr.bf16.gmra.mrb[0].mxu0 %v519
        %v626 = vpop.f32.mrb[0].mxu0
        %v627 = vadd.f32 %v441, %v626
        %v628 = vpop.f32.mrb[0].mxu0
        %v629 = vpop.f32.mrb[0].mxu0
        %v630 = vadd.f32 %v441, %v629
        %v631 = vpop.f32.mrb[0].mxu0
        %632 = vmatprep.mubr.bf16.mxu0 0
        %633 = vmatmul.mubr.bf16.gmra.mrb[0].mxu0 %v522
        %v634 = vpop.f32.mrb[0].mxu0
        %v635 = vadd.f32 %v441, %v634
        %v636 = vpop.f32.mrb[0].mxu0
        %v637 = vpop.f32.mrb[0].mxu0
        %v638 = vadd.f32 %v441, %v637
        %v639 = vpop.f32.mrb[0].mxu0
        %640 = vdwg.mxu0
        %v641 = vmax.f32 %v563, 0.0
        %v642 = vmax.f32 %v566, 0.0
        %v643 = vmax.f32 %v571, 0.0
        %v644 = vmax.f32 %v574, 0.0
        %v645 = vmax.f32 %v579, 0.0
        %v646 = vmax.f32 %v582, 0.0
        %v647 = vmax.f32 %v587, 0.0
        %v648 = vmax.f32 %v590, 0.0
        %v649 = vmax.f32 %v595, 0.0
        %v650 = vmax.f32 %v598, 0.0
        %v651 = vmax.f32 %v603, 0.0
        %v652 = vmax.f32 %v606, 0.0
        %v653 = vmax.f32 %v611, 0.0
        %v654 = vmax.f32 %v614, 0.0
        %v655 = vmax.f32 %v619, 0.0
        %v656 = vmax.f32 %v622, 0.0
        %v657 = vmax.f32 %v627, 0.0
        %v658 = vmax.f32 %v630, 0.0
        %v659 = vmax.f32 %v635, 0.0
        %v660 = vmax.f32 %v638, 0.0
        %v661 = vlaneseq
        %v662 = vshrl.u32 %v661, 7
        %v663 = vadd.s32 %v662, 8
        %v664 = vadd.s32 %v662, 16
        %v665 = vadd.s32 %v662, 24
        %v666 = vadd.s32 %v662, 32
        %v667 = vadd.s32 %v662, 40
        %v668 = vadd.s32 %v662, 48
        %v669 = vadd.s32 %v662, 56
        %v670 = vadd.s32 %v662, 64
        %v671 = vadd.s32 %v662, 72
        %v672 = vadd.s32 %v662, 80
        %v673 = vadd.s32 %v662, 88
        %v674 = vadd.s32 %v662, 96
        %v675 = vadd.s32 %v662, 104
        %v676 = vadd.s32 %v662, 112
        %v677 = vadd.s32 %v662, 120
        %v678 = vadd.s32 %v662, 128
        %v679 = vadd.s32 %v662, 136
        %v680 = vadd.s32 %v662, 144
        %v681 = vadd.s32 %v662, 152
        %p682 = scmp.gt.s32.totalorder %s30, 0
        %vm683 = vcmp.ge.s32.totalorder %v662, 16
        %vm684 = vcmp.ge.s32.totalorder %v663, 16
        %vm685 = vcmp.ge.s32.totalorder %v664, 16
        %vm686 = vcmp.ge.s32.totalorder %v665, 16
        %vm687 = vcmp.ge.s32.totalorder %v666, 16
        %vm688 = vcmp.ge.s32.totalorder %v667, 16
        %vm689 = vcmp.ge.s32.totalorder %v668, 16
        %vm690 = vcmp.ge.s32.totalorder %v669, 16
        %vm691 = vcmp.ge.s32.totalorder %v670, 16
        %vm692 = vcmp.ge.s32.totalorder %v671, 16
        %vm693 = vcmp.ge.s32.totalorder %v672, 16
        %vm694 = vcmp.ge.s32.totalorder %v673, 16
        %vm695 = vcmp.ge.s32.totalorder %v674, 16
        %vm696 = vcmp.ge.s32.totalorder %v675, 16
        %vm697 = vcmp.ge.s32.totalorder %v676, 16
        %vm698 = vcmp.ge.s32.totalorder %v677, 16
        %vm699 = vcmp.ge.s32.totalorder %v678, 16
        %vm700 = vcmp.ge.s32.totalorder %v679, 16
        %vm701 = vcmp.ge.s32.totalorder %v680, 16
        %vm702 = vcmp.ge.s32.totalorder %v681, 16
        %s703 = scalar_select %p682, 1, 0
        %v704 = vstv %s703
        %vm705 = vcmp.eq.s32.totalorder %v704, 1
        %vm706 = vmor %vm705, %vm683
        %vm707 = vmor %vm705, %vm684
        %vm708 = vmor %vm705, %vm685
        %vm709 = vmor %vm705, %vm686
        %vm710 = vmor %vm705, %vm687
        %vm711 = vmor %vm705, %vm688
        %vm712 = vmor %vm705, %vm689
        %vm713 = vmor %vm705, %vm690
        %vm714 = vmor %vm705, %vm691
        %vm715 = vmor %vm705, %vm692
        %vm716 = vmor %vm705, %vm693
        %vm717 = vmor %vm705, %vm694
        %vm718 = vmor %vm705, %vm695
        %vm719 = vmor %vm705, %vm696
        %vm720 = vmor %vm705, %vm697
        %vm721 = vmor %vm705, %vm698
        %vm722 = vmor %vm705, %vm699
        %vm723 = vmor %vm705, %vm700
        %vm724 = vmor %vm705, %vm701
        %vm725 = vmor %vm705, %vm702
        %p726 = scmp.lt.s32.totalorder %s30, 1
        %vm727 = vcmp.lt.s32.totalorder %v662, 144
        %vm728 = vcmp.lt.s32.totalorder %v663, 144
        %vm729 = vcmp.lt.s32.totalorder %v664, 144
        %vm730 = vcmp.lt.s32.totalorder %v665, 144
        %vm731 = vcmp.lt.s32.totalorder %v666, 144
        %vm732 = vcmp.lt.s32.totalorder %v667, 144
        %vm733 = vcmp.lt.s32.totalorder %v668, 144
        %vm734 = vcmp.lt.s32.totalorder %v669, 144
        %vm735 = vcmp.lt.s32.totalorder %v670, 144
        %vm736 = vcmp.lt.s32.totalorder %v671, 144
        %vm737 = vcmp.lt.s32.totalorder %v672, 144
        %vm738 = vcmp.lt.s32.totalorder %v673, 144
        %vm739 = vcmp.lt.s32.totalorder %v674, 144
        %vm740 = vcmp.lt.s32.totalorder %v675, 144
        %vm741 = vcmp.lt.s32.totalorder %v676, 144
        %vm742 = vcmp.lt.s32.totalorder %v677, 144
        %vm743 = vcmp.lt.s32.totalorder %v678, 144
        %vm744 = vcmp.lt.s32.totalorder %v679, 144
        %vm745 = vcmp.lt.s32.totalorder %v680, 144
        %vm746 = vcmp.lt.s32.totalorder %v681, 144
        %s747 = scalar_select %p726, 1, 0
        %v748 = vstv %s747
        %vm749 = vcmp.eq.s32.totalorder %v748, 1
        %vm750 = vmor %vm749, %vm727
        %vm751 = vmor %vm749, %vm728
        %vm752 = vmor %vm749, %vm729
        %vm753 = vmor %vm749, %vm730
        %vm754 = vmor %vm749, %vm731
        %vm755 = vmor %vm749, %vm732
        %vm756 = vmor %vm749, %vm733
        %vm757 = vmor %vm749, %vm734
        %vm758 = vmor %vm749, %vm735
        %vm759 = vmor %vm749, %vm736
        %vm760 = vmor %vm749, %vm737
        %vm761 = vmor %vm749, %vm738
        %vm762 = vmor %vm749, %vm739
        %vm763 = vmor %vm749, %vm740
        %vm764 = vmor %vm749, %vm741
        %vm765 = vmor %vm749, %vm742
        %vm766 = vmor %vm749, %vm743
        %vm767 = vmor %vm749, %vm744
        %vm768 = vmor %vm749, %vm745
        %vm769 = vmor %vm749, %vm746
        %vm770 = vmand %vm706, %vm750
        %vm771 = vmand %vm707, %vm751
        %vm772 = vmand %vm708, %vm752
        %vm773 = vmand %vm709, %vm753
        %vm774 = vmand %vm710, %vm754
        %vm775 = vmand %vm711, %vm755
        %vm776 = vmand %vm712, %vm756
        %vm777 = vmand %vm713, %vm757
        %vm778 = vmand %vm714, %vm758
        %vm779 = vmand %vm715, %vm759
        %vm780 = vmand %vm716, %vm760
        %vm781 = vmand %vm717, %vm761
        %vm782 = vmand %vm718, %vm762
        %vm783 = vmand %vm719, %vm763
        %vm784 = vmand %vm720, %vm764
        %vm785 = vmand %vm721, %vm765
        %vm786 = vmand %vm722, %vm766
        %vm787 = vmand %vm723, %vm767
        %vm788 = vmand %vm724, %vm768
        %vm789 = vmand %vm725, %vm769
        %v790 = vsel %vm770, 1, 0
        %v791 = vsel %vm771, 1, 0
        %v792 = vsel %vm772, 1, 0
        %v793 = vsel %vm773, 1, 0
        %v794 = vsel %vm774, 1, 0
        %v795 = vsel %vm775, 1, 0
        %v796 = vsel %vm776, 1, 0
        %v797 = vsel %vm777, 1, 0
        %v798 = vsel %vm778, 1, 0
        %v799 = vsel %vm779, 1, 0
        %v800 = vsel %vm780, 1, 0
        %v801 = vsel %vm781, 1, 0
        %v802 = vsel %vm782, 1, 0
        %v803 = vsel %vm783, 1, 0
        %v804 = vsel %vm784, 1, 0
        %v805 = vsel %vm785, 1, 0
        %v806 = vsel %vm786, 1, 0
        %v807 = vsel %vm787, 1, 0
        %v808 = vsel %vm788, 1, 0
        %v809 = vsel %vm789, 1, 0
        %vm810 = vcmp.eq.s32.totalorder %v790, 1
        %vm811 = vcmp.eq.s32.totalorder %v791, 1
        %vm812 = vcmp.eq.s32.totalorder %v792, 1
        %vm813 = vcmp.eq.s32.totalorder %v793, 1
        %vm814 = vcmp.eq.s32.totalorder %v794, 1
        %vm815 = vcmp.eq.s32.totalorder %v795, 1
        %vm816 = vcmp.eq.s32.totalorder %v796, 1
        %vm817 = vcmp.eq.s32.totalorder %v797, 1
        %vm818 = vcmp.eq.s32.totalorder %v798, 1
        %vm819 = vcmp.eq.s32.totalorder %v799, 1
        %vm820 = vcmp.eq.s32.totalorder %v800, 1
        %vm821 = vcmp.eq.s32.totalorder %v801, 1
        %vm822 = vcmp.eq.s32.totalorder %v802, 1
        %vm823 = vcmp.eq.s32.totalorder %v803, 1
        %vm824 = vcmp.eq.s32.totalorder %v804, 1
        %vm825 = vcmp.eq.s32.totalorder %v805, 1
        %vm826 = vcmp.eq.s32.totalorder %v806, 1
        %vm827 = vcmp.eq.s32.totalorder %v807, 1
        %vm828 = vcmp.eq.s32.totalorder %v808, 1
        %vm829 = vcmp.eq.s32.totalorder %v809, 1
        %v830 = vsel %vm810, %v641, 0.0
        %v831 = vsel %vm811, %v642, 0.0
        %v832 = vsel %vm812, %v643, 0.0
        %v833 = vsel %vm813, %v644, 0.0
        %v834 = vsel %vm814, %v645, 0.0
        %v835 = vsel %vm815, %v646, 0.0
        %v836 = vsel %vm816, %v647, 0.0
        %v837 = vsel %vm817, %v648, 0.0
        %v838 = vsel %vm818, %v649, 0.0
        %v839 = vsel %vm819, %v650, 0.0
        %v840 = vsel %vm820, %v651, 0.0
        %v841 = vsel %vm821, %v652, 0.0
        %v842 = vsel %vm822, %v653, 0.0
        %v843 = vsel %vm823, %v654, 0.0
        %v844 = vsel %vm824, %v655, 0.0
        %v845 = vsel %vm825, %v656, 0.0
        %v846 = vsel %vm826, %v657, 0.0
        %v847 = vsel %vm827, %v658, 0.0
        %v848 = vsel %vm828, %v659, 0.0
        %v849 = vsel %vm829, %v660, 0.0
        %v850 = vpack.c.bf16 %v833, %v832
        %v851 = vpack.c.bf16 %v835, %v834
        %v852 = vpack.c.bf16 %v837, %v836
        %v853 = vpack.c.bf16 %v839, %v838
        %v854 = vpack.c.bf16 %v841, %v840
        %v855 = vpack.c.bf16 %v843, %v842
        %v856 = vpack.c.bf16 %v845, %v844
        %v857 = vpack.c.bf16 %v847, %v846
        %v858 = vld [vmem:[%s3] sm:$0xf]
        %v859 = vld [vmem:[%s4] sm:$0x1]
        %v861 = vlaneseq
        %v862 = vshrl.u32 %v861, 7
        %v863 = vsub.s32 0, %v862
        %v864 = vrot.slane %v859, %v863
        %vm866 = vcmask 64512
        %v868 = vsel %vm866, %v850, 0
        %v871 = vsel %vm866, %v851, 0
        %v874 = vsel %vm866, %v852, 0
        %v877 = vsel %vm866, %v853, 0
        %v880 = vsel %vm866, %v854, 0
        %v883 = vsel %vm866, %v855, 0
        %v886 = vsel %vm866, %v856, 0
        %v889 = vsel %vm866, %v857, 0
        %vm891 = vcmask 1043456
        %v893 = vsel %vm891, %v858, 0
        %895 = vmatprep.subr.bf16.mxu0 0
        %896 = vmatpush1.bf16.msra.mxu0 %v893
        %897 = vmatprep.subr.bf16.mxu0 0
        %898 = vmatpush1.bf16.msra.mxu0 0
        %899 = vmatprep.subr.bf16.mxu0 0
        %900 = vmatpush1.bf16.msra.mxu0 0
        %901 = vmatprep.subr.bf16.mxu0 0
        %902 = vmatpush1.bf16.msra.mxu0 0
        %903 = vmatprep.subr.bf16.mxu0 0
        %904 = vmatpush1.bf16.msra.mxu0 0
        %905 = vmatprep.subr.bf16.mxu0 0
        %906 = vmatpush1.bf16.msra.mxu0 0
        %907 = vmatprep.subr.bf16.mxu0 0
        %908 = vmatpush1.bf16.msra.mxu0 0
        %909 = vmatprep.subr.bf16.mxu0 0
        %910 = vmatpush1.bf16.msra.mxu0 0
        %911 = vmatprep.subr.bf16.mxu0 0
        %912 = vmatpush1.bf16.msra.mxu0 0
        %913 = vmatprep.subr.bf16.mxu0 0
        %914 = vmatpush1.bf16.msra.mxu0 0
        %915 = vmatprep.subr.bf16.mxu0 0
        %916 = vmatpush1.bf16.msra.mxu0 0
        %917 = vmatprep.subr.bf16.mxu0 0
        %918 = vmatpush1.bf16.msra.mxu0 0
        %919 = vmatprep.subr.bf16.mxu0 0
        %920 = vmatpush1.bf16.msra.mxu0 0
        %921 = vmatprep.subr.bf16.mxu0 0
        %922 = vmatpush1.bf16.msra.mxu0 0
        %923 = vmatprep.subr.bf16.mxu0 0
        %924 = vmatpush1.bf16.msra.mxu0 0
        %925 = vmatprep.subr.bf16.mxu0 0
        %926 = vmatpush1.bf16.msra.mxu0 0
        %927 = vmatprep.mubr.bf16.mxu0 0
        %928 = vmatmul.mubr.bf16.gmra.mrb[0].mxu0 %v868
        %v929 = vpop.f32.mrb[0].mxu0
        %v930 = vadd.f32 %v864, %v929
        %v931 = vpop.f32.mrb[0].mxu0
        %v932 = vpop.f32.mrb[0].mxu0
        %v933 = vadd.f32 %v864, %v932
        %v934 = vpop.f32.mrb[0].mxu0
        %935 = vmatprep.mubr.bf16.mxu0 0
        %936 = vmatmul.mubr.bf16.gmra.mrb[0].mxu0 %v871
        %v937 = vpop.f32.mrb[0].mxu0
        %v938 = vadd.f32 %v864, %v937
        %v939 = vpop.f32.mrb[0].mxu0
        %v940 = vpop.f32.mrb[0].mxu0
        %v941 = vadd.f32 %v864, %v940
        %v942 = vpop.f32.mrb[0].mxu0
        %943 = vmatprep.mubr.bf16.mxu0 0
        %944 = vmatmul.mubr.bf16.gmra.mrb[0].mxu0 %v874
        %v945 = vpop.f32.mrb[0].mxu0
        %v946 = vadd.f32 %v864, %v945
        %v947 = vpop.f32.mrb[0].mxu0
        %v948 = vpop.f32.mrb[0].mxu0
        %v949 = vadd.f32 %v864, %v948
        %v950 = vpop.f32.mrb[0].mxu0
        %951 = vmatprep.mubr.bf16.mxu0 0
        %952 = vmatmul.mubr.bf16.gmra.mrb[0].mxu0 %v877
        %v953 = vpop.f32.mrb[0].mxu0
        %v954 = vadd.f32 %v864, %v953
        %v955 = vpop.f32.mrb[0].mxu0
        %v956 = vpop.f32.mrb[0].mxu0
        %v957 = vadd.f32 %v864, %v956
        %v958 = vpop.f32.mrb[0].mxu0
        %959 = vmatprep.mubr.bf16.mxu0 0
        %960 = vmatmul.mubr.bf16.gmra.mrb[0].mxu0 %v880
        %v961 = vpop.f32.mrb[0].mxu0
        %v962 = vadd.f32 %v864, %v961
        %v963 = vpop.f32.mrb[0].mxu0
        %v964 = vpop.f32.mrb[0].mxu0
        %v965 = vadd.f32 %v864, %v964
        %v966 = vpop.f32.mrb[0].mxu0
        %967 = vmatprep.mubr.bf16.mxu0 0
        %968 = vmatmul.mubr.bf16.gmra.mrb[0].mxu0 %v883
        %v969 = vpop.f32.mrb[0].mxu0
        %v970 = vadd.f32 %v864, %v969
        %v971 = vpop.f32.mrb[0].mxu0
        %v972 = vpop.f32.mrb[0].mxu0
        %v973 = vadd.f32 %v864, %v972
        %v974 = vpop.f32.mrb[0].mxu0
        %975 = vmatprep.mubr.bf16.mxu0 0
        %976 = vmatmul.mubr.bf16.gmra.mrb[0].mxu0 %v886
        %v977 = vpop.f32.mrb[0].mxu0
        %v978 = vadd.f32 %v864, %v977
        %v979 = vpop.f32.mrb[0].mxu0
        %v980 = vpop.f32.mrb[0].mxu0
        %v981 = vadd.f32 %v864, %v980
        %v982 = vpop.f32.mrb[0].mxu0
        %983 = vmatprep.mubr.bf16.mxu0 0
        %984 = vmatmul.mubr.bf16.gmra.mrb[0].mxu0 %v889
        %v985 = vpop.f32.mrb[0].mxu0
        %v986 = vadd.f32 %v864, %v985
        %v987 = vpop.f32.mrb[0].mxu0
        %v988 = vpop.f32.mrb[0].mxu0
        %v989 = vadd.f32 %v864, %v988
        %v990 = vpop.f32.mrb[0].mxu0
        %991 = vdwg.mxu0
        %v992 = vmax.f32 %v930, 0.0
        %v993 = vmax.f32 %v933, 0.0
        %v994 = vmax.f32 %v938, 0.0
        %v995 = vmax.f32 %v941, 0.0
        %v996 = vmax.f32 %v946, 0.0
        %v997 = vmax.f32 %v949, 0.0
        %v998 = vmax.f32 %v954, 0.0
        %v999 = vmax.f32 %v957, 0.0
        %v1000 = vmax.f32 %v962, 0.0
        %v1001 = vmax.f32 %v965, 0.0
        %v1002 = vmax.f32 %v970, 0.0
        %v1003 = vmax.f32 %v973, 0.0
        %v1004 = vmax.f32 %v978, 0.0
        %v1005 = vmax.f32 %v981, 0.0
        %v1006 = vmax.f32 %v986, 0.0
        %v1007 = vmax.f32 %v989, 0.0
        %v1008 = vld [vmem:[%s7] sm:$0x1]
        %v1010 = vlaneseq
        %v1011 = vshrl.u32 %v1010, 7
        %v1012 = vsub.s32 0, %v1011
        %v1013 = vrot.slane %v1008, %v1012
        %v1015 = vmul.f32 %v992, %v1013
        %v1016 = vmul.f32 %v993, %v1013
        %v1017 = vmul.f32 %v994, %v1013
        %v1018 = vmul.f32 %v995, %v1013
        %v1019 = vmul.f32 %v996, %v1013
        %v1020 = vmul.f32 %v997, %v1013
        %v1021 = vmul.f32 %v998, %v1013
        %v1022 = vmul.f32 %v999, %v1013
        %v1023 = vmul.f32 %v1000, %v1013
        %v1024 = vmul.f32 %v1001, %v1013
        %v1025 = vmul.f32 %v1002, %v1013
        %v1026 = vmul.f32 %v1003, %v1013
        %v1027 = vmul.f32 %v1004, %v1013
        %v1028 = vmul.f32 %v1005, %v1013
        %v1029 = vmul.f32 %v1006, %v1013
        %v1030 = vmul.f32 %v1007, %v1013
        %v1031 = vld [vmem:[%s8] sm:$0x1]
        %v1033 = vlaneseq
        %v1034 = vshrl.u32 %v1033, 7
        %v1035 = vsub.s32 0, %v1034
        %v1036 = vrot.slane %v1031, %v1035
        %v1038 = vadd.f32 %v1015, %v1036
        %v1039 = vadd.f32 %v1016, %v1036
        %v1040 = vadd.f32 %v1017, %v1036
        %v1041 = vadd.f32 %v1018, %v1036
        %v1042 = vadd.f32 %v1019, %v1036
        %v1043 = vadd.f32 %v1020, %v1036
        %v1044 = vadd.f32 %v1021, %v1036
        %v1045 = vadd.f32 %v1022, %v1036
        %v1046 = vadd.f32 %v1023, %v1036
        %v1047 = vadd.f32 %v1024, %v1036
        %v1048 = vadd.f32 %v1025, %v1036
        %v1049 = vadd.f32 %v1026, %v1036
        %v1050 = vadd.f32 %v1027, %v1036
        %v1051 = vadd.f32 %v1028, %v1036
        %v1052 = vadd.f32 %v1029, %v1036
        %v1053 = vadd.f32 %v1030, %v1036
        %vm1074 = vcmask 1040384
        %v1075 = vrot.slane %v830, 7
        %v1076 = vrot.slane %v831, 7
        %v1077 = vsel %vm1074, %v1075, %v1076
        %v1078 = vrot.slane %v832, 7
        %v1079 = vrot.slane %v833, 7
        %v1080 = vsel %vm1074, %v1078, %v1079
        %v1081 = vrot.slane %v834, 7
        %v1082 = vrot.slane %v835, 7
        %v1083 = vsel %vm1074, %v1081, %v1082
        %v1084 = vrot.slane %v836, 7
        %v1085 = vrot.slane %v837, 7
        %v1086 = vsel %vm1074, %v1084, %v1085
        %v1087 = vrot.slane %v838, 7
        %v1088 = vrot.slane %v839, 7
        %v1089 = vsel %vm1074, %v1087, %v1088
        %v1090 = vrot.slane %v840, 7
        %v1091 = vrot.slane %v841, 7
        %v1092 = vsel %vm1074, %v1090, %v1091
        %v1093 = vrot.slane %v842, 7
        %v1094 = vrot.slane %v843, 7
        %v1095 = vsel %vm1074, %v1093, %v1094
        %v1096 = vrot.slane %v844, 7
        %v1097 = vrot.slane %v845, 7
        %v1098 = vsel %vm1074, %v1096, %v1097
        %v1099 = vrot.slane %v846, 7
        %v1100 = vrot.slane %v847, 7
        %v1101 = vsel %vm1074, %v1099, %v1100
        %v1102 = vrot.slane %v848, 7
        %v1103 = vrot.slane %v849, 7
        %v1104 = vsel %vm1074, %v1102, %v1103
        %v1133 = vsel %vm1074, 0.0, %v1075
        %v1134 = vsel %vm1074, 0.0, %v1078
        %v1135 = vsel %vm1074, 0.0, %v1081
        %v1136 = vsel %vm1074, 0.0, %v1084
        %v1137 = vsel %vm1074, 0.0, %v1087
        %v1138 = vsel %vm1074, 0.0, %v1090
        %v1139 = vsel %vm1074, 0.0, %v1093
        %v1140 = vsel %vm1074, 0.0, %v1096
        %v1141 = vsel %vm1074, 0.0, %v1099
        %v1142 = vsel %vm1074, 0.0, %v1102
        %v1143 = vsel %vm1074, %v1076, 0.0
        %v1144 = vsel %vm1074, %v1079, 0.0
        %v1145 = vsel %vm1074, %v1082, 0.0
        %v1146 = vsel %vm1074, %v1085, 0.0
        %v1147 = vsel %vm1074, %v1088, 0.0
        %v1148 = vsel %vm1074, %v1091, 0.0
        %v1149 = vsel %vm1074, %v1094, 0.0
        %v1150 = vsel %vm1074, %v1097, 0.0
        %v1151 = vsel %vm1074, %v1100, 0.0
        %v1152 = vsel %vm1074, %v1103, 0.0
        %vm1169 = vcmask 1046528
        %v1170 = vrot.slane %v1133, 1
        %v1171 = vrot.slane %v1077, 1
        %v1172 = vsel %vm1169, %v1170, %v1171
        %v1173 = vrot.slane %v1143, 1
        %v1174 = vsel %vm1169, %v1171, %v1173
        %v1175 = vrot.slane %v1134, 1
        %v1176 = vrot.slane %v1080, 1
        %v1177 = vsel %vm1169, %v1175, %v1176
        %v1178 = vrot.slane %v1144, 1
        %v1179 = vsel %vm1169, %v1176, %v1178
        %v1180 = vrot.slane %v1135, 1
        %v1181 = vrot.slane %v1083, 1
        %v1182 = vsel %vm1169, %v1180, %v1181
        %v1183 = vrot.slane %v1145, 1
        %v1184 = vsel %vm1169, %v1181, %v1183
        %v1185 = vrot.slane %v1136, 1
        %v1186 = vrot.slane %v1086, 1
        %v1187 = vsel %vm1169, %v1185, %v1186
        %v1188 = vrot.slane %v1146, 1
        %v1189 = vsel %vm1169, %v1186, %v1188
        %v1190 = vrot.slane %v1137, 1
        %v1191 = vrot.slane %v1089, 1
        %v1192 = vsel %vm1169, %v1190, %v1191
        %v1193 = vrot.slane %v1147, 1
        %v1194 = vsel %vm1169, %v1191, %v1193
        %v1195 = vrot.slane %v1138, 1
        %v1196 = vrot.slane %v1092, 1
        %v1197 = vsel %vm1169, %v1195, %v1196
        %v1198 = vrot.slane %v1148, 1
        %v1199 = vsel %vm1169, %v1196, %v1198
        %v1200 = vrot.slane %v1139, 1
        %v1201 = vrot.slane %v1095, 1
        %v1202 = vsel %vm1169, %v1200, %v1201
        %v1203 = vrot.slane %v1149, 1
        %v1204 = vsel %vm1169, %v1201, %v1203
        %v1205 = vrot.slane %v1140, 1
        %v1206 = vrot.slane %v1098, 1
        %v1207 = vsel %vm1169, %v1205, %v1206
        %v1208 = vrot.slane %v1150, 1
        %v1209 = vsel %vm1169, %v1206, %v1208
        %vm1210 = vcmask 1045504
        %v1211 = vrot.slane %v1133, 2
        %v1212 = vrot.slane %v1077, 2
        %v1213 = vsel %vm1210, %v1211, %v1212
        %v1214 = vrot.slane %v1143, 2
        %v1215 = vsel %vm1210, %v1212, %v1214
        %v1216 = vrot.slane %v1134, 2
        %v1217 = vrot.slane %v1080, 2
        %v1218 = vsel %vm1210, %v1216, %v1217
        %v1219 = vrot.slane %v1144, 2
        %v1220 = vsel %vm1210, %v1217, %v1219
        %v1221 = vrot.slane %v1135, 2
        %v1222 = vrot.slane %v1083, 2
        %v1223 = vsel %vm1210, %v1221, %v1222
        %v1224 = vrot.slane %v1145, 2
        %v1225 = vsel %vm1210, %v1222, %v1224
        %v1226 = vrot.slane %v1136, 2
        %v1227 = vrot.slane %v1086, 2
        %v1228 = vsel %vm1210, %v1226, %v1227
        %v1229 = vrot.slane %v1146, 2
        %v1230 = vsel %vm1210, %v1227, %v1229
        %v1231 = vrot.slane %v1137, 2
        %v1232 = vrot.slane %v1089, 2
        %v1233 = vsel %vm1210, %v1231, %v1232
        %v1234 = vrot.slane %v1147, 2
        %v1235 = vsel %vm1210, %v1232, %v1234
        %v1236 = vrot.slane %v1138, 2
        %v1237 = vrot.slane %v1092, 2
        %v1238 = vsel %vm1210, %v1236, %v1237
        %v1239 = vrot.slane %v1148, 2
        %v1240 = vsel %vm1210, %v1237, %v1239
        %v1241 = vrot.slane %v1139, 2
        %v1242 = vrot.slane %v1095, 2
        %v1243 = vsel %vm1210, %v1241, %v1242
        %v1244 = vrot.slane %v1149, 2
        %v1245 = vsel %vm1210, %v1242, %v1244
        %v1246 = vrot.slane %v1140, 2
        %v1247 = vrot.slane %v1098, 2
        %v1248 = vsel %vm1210, %v1246, %v1247
        %v1249 = vrot.slane %v1150, 2
        %v1250 = vsel %vm1210, %v1247, %v1249
        %v1253 = vrot.slane %v1141, 1
        %v1254 = vrot.slane %v1101, 1
        %v1255 = vsel %vm1169, %v1253, %v1254
        %v1256 = vrot.slane %v1151, 1
        %v1257 = vsel %vm1169, %v1254, %v1256
        %v1258 = vrot.slane %v1141, 2
        %v1259 = vrot.slane %v1101, 2
        %v1260 = vsel %vm1210, %v1258, %v1259
        %v1261 = vrot.slane %v1151, 2
        %v1262 = vsel %vm1210, %v1259, %v1261
        %v1265 = vrot.slane %v1142, 1
        %v1266 = vrot.slane %v1104, 1
        %v1267 = vsel %vm1169, %v1265, %v1266
        %v1268 = vrot.slane %v1152, 1
        %v1269 = vsel %vm1169, %v1266, %v1268
        %v1270 = vrot.slane %v1142, 2
        %v1271 = vrot.slane %v1104, 2
        %v1272 = vsel %vm1210, %v1270, %v1271
        %v1273 = vrot.slane %v1152, 2
        %v1274 = vsel %vm1210, %v1271, %v1273
        %1275 = vrot.lane.b32.xlu0 %v1172, 8
        %v1276 = vpop.permute.xlu0 %1275
        %1277 = vrot.lane.b32.xlu0 %v1174, 8
        %v1278 = vpop.permute.xlu0 %1277
        %1279 = vrot.lane.b32.xlu0 %v1177, 8
        %v1280 = vpop.permute.xlu0 %1279
        %1281 = vrot.lane.b32.xlu0 %v1179, 8
        %v1282 = vpop.permute.xlu0 %1281
        %1283 = vrot.lane.b32.xlu0 %v1182, 8
        %v1284 = vpop.permute.xlu0 %1283
        %1285 = vrot.lane.b32.xlu0 %v1184, 8
        %v1286 = vpop.permute.xlu0 %1285
        %1287 = vrot.lane.b32.xlu0 %v1187, 8
        %v1288 = vpop.permute.xlu0 %1287
        %1289 = vrot.lane.b32.xlu0 %v1189, 8
        %v1290 = vpop.permute.xlu0 %1289
        %1291 = vrot.lane.b32.xlu0 %v1192, 8
        %v1292 = vpop.permute.xlu0 %1291
        %1293 = vrot.lane.b32.xlu0 %v1194, 8
        %v1294 = vpop.permute.xlu0 %1293
        %1295 = vrot.lane.b32.xlu0 %v1197, 8
        %v1296 = vpop.permute.xlu0 %1295
        %1297 = vrot.lane.b32.xlu0 %v1199, 8
        %v1298 = vpop.permute.xlu0 %1297
        %1299 = vrot.lane.b32.xlu0 %v1202, 8
        %v1300 = vpop.permute.xlu0 %1299
        %1301 = vrot.lane.b32.xlu0 %v1204, 8
        %v1302 = vpop.permute.xlu0 %1301
        %1303 = vrot.lane.b32.xlu0 %v1207, 8
        %v1304 = vpop.permute.xlu0 %1303
        %1305 = vrot.lane.b32.xlu0 %v1209, 8
        %v1306 = vpop.permute.xlu0 %1305
        %1323 = vrot.lane.b32.xlu0 %v1213, 16
        %v1324 = vpop.permute.xlu0 %1323
        %1325 = vrot.lane.b32.xlu0 %v1215, 16
        %v1326 = vpop.permute.xlu0 %1325
        %1327 = vrot.lane.b32.xlu0 %v1218, 16
        %v1328 = vpop.permute.xlu0 %1327
        %1329 = vrot.lane.b32.xlu0 %v1220, 16
        %v1330 = vpop.permute.xlu0 %1329
        %1331 = vrot.lane.b32.xlu0 %v1223, 16
        %v1332 = vpop.permute.xlu0 %1331
        %1333 = vrot.lane.b32.xlu0 %v1225, 16
        %v1334 = vpop.permute.xlu0 %1333
        %1335 = vrot.lane.b32.xlu0 %v1228, 16
        %v1336 = vpop.permute.xlu0 %1335
        %1337 = vrot.lane.b32.xlu0 %v1230, 16
        %v1338 = vpop.permute.xlu0 %1337
        %1339 = vrot.lane.b32.xlu0 %v1233, 16
        %v1340 = vpop.permute.xlu0 %1339
        %1341 = vrot.lane.b32.xlu0 %v1235, 16
        %v1342 = vpop.permute.xlu0 %1341
        %1343 = vrot.lane.b32.xlu0 %v1238, 16
        %v1344 = vpop.permute.xlu0 %1343
        %1345 = vrot.lane.b32.xlu0 %v1240, 16
        %v1346 = vpop.permute.xlu0 %1345
        %1347 = vrot.lane.b32.xlu0 %v1243, 16
        %v1348 = vpop.permute.xlu0 %1347
        %1349 = vrot.lane.b32.xlu0 %v1245, 16
        %v1350 = vpop.permute.xlu0 %1349
        %1351 = vrot.lane.b32.xlu0 %v1248, 16
        %v1352 = vpop.permute.xlu0 %1351
        %1353 = vrot.lane.b32.xlu0 %v1250, 16
        %v1354 = vpop.permute.xlu0 %1353
        %1371 = vrot.lane.b32.xlu0 %v1134, 24
        %v1372 = vpop.permute.xlu0 %1371
        %1373 = vrot.lane.b32.xlu0 %v1080, 24
        %v1374 = vpop.permute.xlu0 %1373
        %1375 = vrot.lane.b32.xlu0 %v1135, 24
        %v1376 = vpop.permute.xlu0 %1375
        %1377 = vrot.lane.b32.xlu0 %v1083, 24
        %v1378 = vpop.permute.xlu0 %1377
        %1379 = vrot.lane.b32.xlu0 %v1136, 24
        %v1380 = vpop.permute.xlu0 %1379
        %1381 = vrot.lane.b32.xlu0 %v1086, 24
        %v1382 = vpop.permute.xlu0 %1381
        %1383 = vrot.lane.b32.xlu0 %v1137, 24
        %v1384 = vpop.permute.xlu0 %1383
        %1385 = vrot.lane.b32.xlu0 %v1089, 24
        %v1386 = vpop.permute.xlu0 %1385
        %1387 = vrot.lane.b32.xlu0 %v1138, 24
        %v1388 = vpop.permute.xlu0 %1387
        %1389 = vrot.lane.b32.xlu0 %v1092, 24
        %v1390 = vpop.permute.xlu0 %1389
        %1391 = vrot.lane.b32.xlu0 %v1139, 24
        %v1392 = vpop.permute.xlu0 %1391
        %1393 = vrot.lane.b32.xlu0 %v1095, 24
        %v1394 = vpop.permute.xlu0 %1393
        %1395 = vrot.lane.b32.xlu0 %v1140, 24
        %v1396 = vpop.permute.xlu0 %1395
        %1397 = vrot.lane.b32.xlu0 %v1098, 24
        %v1398 = vpop.permute.xlu0 %1397
        %1399 = vrot.lane.b32.xlu0 %v1141, 24
        %v1400 = vpop.permute.xlu0 %1399
        %1401 = vrot.lane.b32.xlu0 %v1101, 24
        %v1402 = vpop.permute.xlu0 %1401
        %1419 = vrot.lane.b32.xlu0 %v1177, 32
        %v1420 = vpop.permute.xlu0 %1419
        %1421 = vrot.lane.b32.xlu0 %v1179, 32
        %v1422 = vpop.permute.xlu0 %1421
        %1423 = vrot.lane.b32.xlu0 %v1182, 32
        %v1424 = vpop.permute.xlu0 %1423
        %1425 = vrot.lane.b32.xlu0 %v1184, 32
        %v1426 = vpop.permute.xlu0 %1425
        %1427 = vrot.lane.b32.xlu0 %v1187, 32
        %v1428 = vpop.permute.xlu0 %1427
        %1429 = vrot.lane.b32.xlu0 %v1189, 32
        %v1430 = vpop.permute.xlu0 %1429
        %1431 = vrot.lane.b32.xlu0 %v1192, 32
        %v1432 = vpop.permute.xlu0 %1431
        %1433 = vrot.lane.b32.xlu0 %v1194, 32
        %v1434 = vpop.permute.xlu0 %1433
        %1435 = vrot.lane.b32.xlu0 %v1197, 32
        %v1436 = vpop.permute.xlu0 %1435
        %1437 = vrot.lane.b32.xlu0 %v1199, 32
        %v1438 = vpop.permute.xlu0 %1437
        %1439 = vrot.lane.b32.xlu0 %v1202, 32
        %v1440 = vpop.permute.xlu0 %1439
        %1441 = vrot.lane.b32.xlu0 %v1204, 32
        %v1442 = vpop.permute.xlu0 %1441
        %1443 = vrot.lane.b32.xlu0 %v1207, 32
        %v1444 = vpop.permute.xlu0 %1443
        %1445 = vrot.lane.b32.xlu0 %v1209, 32
        %v1446 = vpop.permute.xlu0 %1445
        %1447 = vrot.lane.b32.xlu0 %v1255, 32
        %v1448 = vpop.permute.xlu0 %1447
        %1449 = vrot.lane.b32.xlu0 %v1257, 32
        %v1450 = vpop.permute.xlu0 %1449
        %1467 = vrot.lane.b32.xlu0 %v1218, 40
        %v1468 = vpop.permute.xlu0 %1467
        %1469 = vrot.lane.b32.xlu0 %v1220, 40
        %v1470 = vpop.permute.xlu0 %1469
        %1471 = vrot.lane.b32.xlu0 %v1223, 40
        %v1472 = vpop.permute.xlu0 %1471
        %1473 = vrot.lane.b32.xlu0 %v1225, 40
        %v1474 = vpop.permute.xlu0 %1473
        %1475 = vrot.lane.b32.xlu0 %v1228, 40
        %v1476 = vpop.permute.xlu0 %1475
        %1477 = vrot.lane.b32.xlu0 %v1230, 40
        %v1478 = vpop.permute.xlu0 %1477
        %1479 = vrot.lane.b32.xlu0 %v1233, 40
        %v1480 = vpop.permute.xlu0 %1479
        %1481 = vrot.lane.b32.xlu0 %v1235, 40
        %v1482 = vpop.permute.xlu0 %1481
        %1483 = vrot.lane.b32.xlu0 %v1238, 40
        %v1484 = vpop.permute.xlu0 %1483
        %1485 = vrot.lane.b32.xlu0 %v1240, 40
        %v1486 = vpop.permute.xlu0 %1485
        %1487 = vrot.lane.b32.xlu0 %v1243, 40
        %v1488 = vpop.permute.xlu0 %1487
        %1489 = vrot.lane.b32.xlu0 %v1245, 40
        %v1490 = vpop.permute.xlu0 %1489
        %1491 = vrot.lane.b32.xlu0 %v1248, 40
        %v1492 = vpop.permute.xlu0 %1491
        %1493 = vrot.lane.b32.xlu0 %v1250, 40
        %v1494 = vpop.permute.xlu0 %1493
        %1495 = vrot.lane.b32.xlu0 %v1260, 40
        %v1496 = vpop.permute.xlu0 %1495
        %1497 = vrot.lane.b32.xlu0 %v1262, 40
        %v1498 = vpop.permute.xlu0 %1497
        %1515 = vrot.lane.b32.xlu0 %v1135, 48
        %v1516 = vpop.permute.xlu0 %1515
        %1517 = vrot.lane.b32.xlu0 %v1083, 48
        %v1518 = vpop.permute.xlu0 %1517
        %1519 = vrot.lane.b32.xlu0 %v1136, 48
        %v1520 = vpop.permute.xlu0 %1519
        %1521 = vrot.lane.b32.xlu0 %v1086, 48
        %v1522 = vpop.permute.xlu0 %1521
        %1523 = vrot.lane.b32.xlu0 %v1137, 48
        %v1524 = vpop.permute.xlu0 %1523
        %1525 = vrot.lane.b32.xlu0 %v1089, 48
        %v1526 = vpop.permute.xlu0 %1525
        %1527 = vrot.lane.b32.xlu0 %v1138, 48
        %v1528 = vpop.permute.xlu0 %1527
        %1529 = vrot.lane.b32.xlu0 %v1092, 48
        %v1530 = vpop.permute.xlu0 %1529
        %1531 = vrot.lane.b32.xlu0 %v1139, 48
        %v1532 = vpop.permute.xlu0 %1531
        %1533 = vrot.lane.b32.xlu0 %v1095, 48
        %v1534 = vpop.permute.xlu0 %1533
        %1535 = vrot.lane.b32.xlu0 %v1140, 48
        %v1536 = vpop.permute.xlu0 %1535
        %1537 = vrot.lane.b32.xlu0 %v1098, 48
        %v1538 = vpop.permute.xlu0 %1537
        %1539 = vrot.lane.b32.xlu0 %v1141, 48
        %v1540 = vpop.permute.xlu0 %1539
        %1541 = vrot.lane.b32.xlu0 %v1101, 48
        %v1542 = vpop.permute.xlu0 %1541
        %1543 = vrot.lane.b32.xlu0 %v1142, 48
        %v1544 = vpop.permute.xlu0 %1543
        %1545 = vrot.lane.b32.xlu0 %v1104, 48
        %v1546 = vpop.permute.xlu0 %1545
        %1563 = vrot.lane.b32.xlu0 %v1182, 56
        %v1564 = vpop.permute.xlu0 %1563
        %1565 = vrot.lane.b32.xlu0 %v1184, 56
        %v1566 = vpop.permute.xlu0 %1565
        %1567 = vrot.lane.b32.xlu0 %v1187, 56
        %v1568 = vpop.permute.xlu0 %1567
        %1569 = vrot.lane.b32.xlu0 %v1189, 56
        %v1570 = vpop.permute.xlu0 %1569
        %1571 = vrot.lane.b32.xlu0 %v1192, 56
        %v1572 = vpop.permute.xlu0 %1571
        %1573 = vrot.lane.b32.xlu0 %v1194, 56
        %v1574 = vpop.permute.xlu0 %1573
        %1575 = vrot.lane.b32.xlu0 %v1197, 56
        %v1576 = vpop.permute.xlu0 %1575
        %1577 = vrot.lane.b32.xlu0 %v1199, 56
        %v1578 = vpop.permute.xlu0 %1577
        %1579 = vrot.lane.b32.xlu0 %v1202, 56
        %v1580 = vpop.permute.xlu0 %1579
        %1581 = vrot.lane.b32.xlu0 %v1204, 56
        %v1582 = vpop.permute.xlu0 %1581
        %1583 = vrot.lane.b32.xlu0 %v1207, 56
        %v1584 = vpop.permute.xlu0 %1583
        %1585 = vrot.lane.b32.xlu0 %v1209, 56
        %v1586 = vpop.permute.xlu0 %1585
        %1587 = vrot.lane.b32.xlu0 %v1255, 56
        %v1588 = vpop.permute.xlu0 %1587
        %1589 = vrot.lane.b32.xlu0 %v1257, 56
        %v1590 = vpop.permute.xlu0 %1589
        %1591 = vrot.lane.b32.xlu0 %v1267, 56
        %v1592 = vpop.permute.xlu0 %1591
        %1593 = vrot.lane.b32.xlu0 %v1269, 56
        %v1594 = vpop.permute.xlu0 %1593
        %1611 = vrot.lane.b32.xlu0 %v1223, 64
        %v1612 = vpop.permute.xlu0 %1611
        %1613 = vrot.lane.b32.xlu0 %v1225, 64
        %v1614 = vpop.permute.xlu0 %1613
        %1615 = vrot.lane.b32.xlu0 %v1228, 64
        %v1616 = vpop.permute.xlu0 %1615
        %1617 = vrot.lane.b32.xlu0 %v1230, 64
        %v1618 = vpop.permute.xlu0 %1617
        %1619 = vrot.lane.b32.xlu0 %v1233, 64
        %v1620 = vpop.permute.xlu0 %1619
        %1621 = vrot.lane.b32.xlu0 %v1235, 64
        %v1622 = vpop.permute.xlu0 %1621
        %1623 = vrot.lane.b32.xlu0 %v1238, 64
        %v1624 = vpop.permute.xlu0 %1623
        %1625 = vrot.lane.b32.xlu0 %v1240, 64
        %v1626 = vpop.permute.xlu0 %1625
        %1627 = vrot.lane.b32.xlu0 %v1243, 64
        %v1628 = vpop.permute.xlu0 %1627
        %1629 = vrot.lane.b32.xlu0 %v1245, 64
        %v1630 = vpop.permute.xlu0 %1629
        %1631 = vrot.lane.b32.xlu0 %v1248, 64
        %v1632 = vpop.permute.xlu0 %1631
        %1633 = vrot.lane.b32.xlu0 %v1250, 64
        %v1634 = vpop.permute.xlu0 %1633
        %1635 = vrot.lane.b32.xlu0 %v1260, 64
        %v1636 = vpop.permute.xlu0 %1635
        %1637 = vrot.lane.b32.xlu0 %v1262, 64
        %v1638 = vpop.permute.xlu0 %1637
        %1639 = vrot.lane.b32.xlu0 %v1272, 64
        %v1640 = vpop.permute.xlu0 %1639
        %1641 = vrot.lane.b32.xlu0 %v1274, 64
        %v1642 = vpop.permute.xlu0 %1641
        %v1659 = vsel %vm866, %v1133, %v1276
        %v1660 = vsel %vm866, %v1077, %v1278
        %v1661 = vsel %vm866, %v1134, %v1280
        %v1662 = vsel %vm866, %v1080, %v1282
        %v1663 = vsel %vm866, %v1135, %v1284
        %v1664 = vsel %vm866, %v1083, %v1286
        %v1665 = vsel %vm866, %v1136, %v1288
        %v1666 = vsel %vm866, %v1086, %v1290
        %v1667 = vsel %vm866, %v1137, %v1292
        %v1668 = vsel %vm866, %v1089, %v1294
        %v1669 = vsel %vm866, %v1138, %v1296
        %v1670 = vsel %vm866, %v1092, %v1298
        %v1671 = vsel %vm866, %v1139, %v1300
        %v1672 = vsel %vm866, %v1095, %v1302
        %v1673 = vsel %vm866, %v1140, %v1304
        %v1674 = vsel %vm866, %v1098, %v1306
        %vm1675 = vcmask 130048
        %v1676 = vsel %vm1675, %v1659, %v1324
        %v1677 = vsel %vm1675, %v1660, %v1326
        %v1678 = vsel %vm1675, %v1661, %v1328
        %v1679 = vsel %vm1675, %v1662, %v1330
        %v1680 = vsel %vm1675, %v1663, %v1332
        %v1681 = vsel %vm1675, %v1664, %v1334
        %v1682 = vsel %vm1675, %v1665, %v1336
        %v1683 = vsel %vm1675, %v1666, %v1338
        %v1684 = vsel %vm1675, %v1667, %v1340
        %v1685 = vsel %vm1675, %v1668, %v1342
        %v1686 = vsel %vm1675, %v1669, %v1344
        %v1687 = vsel %vm1675, %v1670, %v1346
        %v1688 = vsel %vm1675, %v1671, %v1348
        %v1689 = vsel %vm1675, %v1672, %v1350
        %v1690 = vsel %vm1675, %v1673, %v1352
        %v1691 = vsel %vm1675, %v1674, %v1354
        %vm1692 = vcmask 195584
        %v1693 = vsel %vm1692, %v1676, %v1372
        %v1694 = vsel %vm1692, %v1677, %v1374
        %v1695 = vsel %vm1692, %v1678, %v1376
        %v1696 = vsel %vm1692, %v1679, %v1378
        %v1697 = vsel %vm1692, %v1680, %v1380
        %v1698 = vsel %vm1692, %v1681, %v1382
        %v1699 = vsel %vm1692, %v1682, %v1384
        %v1700 = vsel %vm1692, %v1683, %v1386
        %v1701 = vsel %vm1692, %v1684, %v1388
        %v1702 = vsel %vm1692, %v1685, %v1390
        %v1703 = vsel %vm1692, %v1686, %v1392
        %v1704 = vsel %vm1692, %v1687, %v1394
        %v1705 = vsel %vm1692, %v1688, %v1396
        %v1706 = vsel %vm1692, %v1689, %v1398
        %v1707 = vsel %vm1692, %v1690, %v1400
        %v1708 = vsel %vm1692, %v1691, %v1402
        %vm1709 = vcmask 261120
        %v1710 = vsel %vm1709, %v1693, %v1420
        %v1711 = vsel %vm1709, %v1694, %v1422
        %v1712 = vsel %vm1709, %v1695, %v1424
        %v1713 = vsel %vm1709, %v1696, %v1426
        %v1714 = vsel %vm1709, %v1697, %v1428
        %v1715 = vsel %vm1709, %v1698, %v1430
        %v1716 = vsel %vm1709, %v1699, %v1432
        %v1717 = vsel %vm1709, %v1700, %v1434
        %v1718 = vsel %vm1709, %v1701, %v1436
        %v1719 = vsel %vm1709, %v1702, %v1438
        %v1720 = vsel %vm1709, %v1703, %v1440
        %v1721 = vsel %vm1709, %v1704, %v1442
        %v1722 = vsel %vm1709, %v1705, %v1444
        %v1723 = vsel %vm1709, %v1706, %v1446
        %v1724 = vsel %vm1709, %v1707, %v1448
        %v1725 = vsel %vm1709, %v1708, %v1450
        %vm1726 = vcmask 326656
        %v1727 = vsel %vm1726, %v1710, %v1468
        %v1728 = vsel %vm1726, %v1711, %v1470
        %v1729 = vsel %vm1726, %v1712, %v1472
        %v1730 = vsel %vm1726, %v1713, %v1474
        %v1731 = vsel %vm1726, %v1714, %v1476
        %v1732 = vsel %vm1726, %v1715, %v1478
        %v1733 = vsel %vm1726, %v1716, %v1480
        %v1734 = vsel %vm1726, %v1717, %v1482
        %v1735 = vsel %vm1726, %v1718, %v1484
        %v1736 = vsel %vm1726, %v1719, %v1486
        %v1737 = vsel %vm1726, %v1720, %v1488
        %v1738 = vsel %vm1726, %v1721, %v1490
        %v1739 = vsel %vm1726, %v1722, %v1492
        %v1740 = vsel %vm1726, %v1723, %v1494
        %v1741 = vsel %vm1726, %v1724, %v1496
        %v1742 = vsel %vm1726, %v1725, %v1498
        %vm1743 = vcmask 392192
        %v1744 = vsel %vm1743, %v1727, %v1516
        %v1745 = vsel %vm1743, %v1728, %v1518
        %v1746 = vsel %vm1743, %v1729, %v1520
        %v1747 = vsel %vm1743, %v1730, %v1522
        %v1748 = vsel %vm1743, %v1731, %v1524
        %v1749 = vsel %vm1743, %v1732, %v1526
        %v1750 = vsel %vm1743, %v1733, %v1528
        %v1751 = vsel %vm1743, %v1734, %v1530
        %v1752 = vsel %vm1743, %v1735, %v1532
        %v1753 = vsel %vm1743, %v1736, %v1534
        %v1754 = vsel %vm1743, %v1737, %v1536
        %v1755 = vsel %vm1743, %v1738, %v1538
        %v1756 = vsel %vm1743, %v1739, %v1540
        %v1757 = vsel %vm1743, %v1740, %v1542
        %v1758 = vsel %vm1743, %v1741, %v1544
        %v1759 = vsel %vm1743, %v1742, %v1546
        %vm1760 = vcmask 457728
        %v1761 = vsel %vm1760, %v1744, %v1564
        %v1762 = vsel %vm1760, %v1745, %v1566
        %v1763 = vsel %vm1760, %v1746, %v1568
        %v1764 = vsel %vm1760, %v1747, %v1570
        %v1765 = vsel %vm1760, %v1748, %v1572
        %v1766 = vsel %vm1760, %v1749, %v1574
        %v1767 = vsel %vm1760, %v1750, %v1576
        %v1768 = vsel %vm1760, %v1751, %v1578
        %v1769 = vsel %vm1760, %v1752, %v1580
        %v1770 = vsel %vm1760, %v1753, %v1582
        %v1771 = vsel %vm1760, %v1754, %v1584
        %v1772 = vsel %vm1760, %v1755, %v1586
        %v1773 = vsel %vm1760, %v1756, %v1588
        %v1774 = vsel %vm1760, %v1757, %v1590
        %v1775 = vsel %vm1760, %v1758, %v1592
        %v1776 = vsel %vm1760, %v1759, %v1594
        %vm1777 = vcmask 523264
        %v1778 = vsel %vm1777, %v1761, %v1612
        %v1779 = vsel %vm1777, %v1762, %v1614
        %v1780 = vsel %vm1777, %v1763, %v1616
        %v1781 = vsel %vm1777, %v1764, %v1618
        %v1782 = vsel %vm1777, %v1765, %v1620
        %v1783 = vsel %vm1777, %v1766, %v1622
        %v1784 = vsel %vm1777, %v1767, %v1624
        %v1785 = vsel %vm1777, %v1768, %v1626
        %v1786 = vsel %vm1777, %v1769, %v1628
        %v1787 = vsel %vm1777, %v1770, %v1630
        %v1788 = vsel %vm1777, %v1771, %v1632
        %v1789 = vsel %vm1777, %v1772, %v1634
        %v1790 = vsel %vm1777, %v1773, %v1636
        %v1791 = vsel %vm1777, %v1774, %v1638
        %v1792 = vsel %vm1777, %v1775, %v1640
        %v1793 = vsel %vm1777, %v1776, %v1642
        %v1794 = vpack.c.bf16 %v1779, %v1778
        %v1795 = vpack.c.bf16 %v1781, %v1780
        %v1796 = vpack.c.bf16 %v1783, %v1782
        %v1797 = vpack.c.bf16 %v1785, %v1784
        %v1798 = vpack.c.bf16 %v1787, %v1786
        %v1799 = vpack.c.bf16 %v1789, %v1788
        %v1800 = vpack.c.bf16 %v1791, %v1790
        %v1801 = vpack.c.bf16 %v1793, %v1792
        %v1802 = vld [vmem:[%s5] sm:$0xf]
        %v1803 = vld [vmem:[%s5 + $0x4] sm:$0xf]
        %v1804 = vld [vmem:[%s5 + $0x8] sm:$0xf]
        %v1805 = vld [vmem:[%s5 + $0xc] sm:$0xf]
        %v1806 = vld [vmem:[%s5 + $0x10] sm:$0xf]
        %v1807 = vld [vmem:[%s5 + $0x14] sm:$0xf]
        %v1808 = vld [vmem:[%s5 + $0x18] sm:$0xf]
        %v1809 = vld [vmem:[%s5 + $0x1c] sm:$0xf]
        %v1810 = vld [vmem:[%s5 + $0x20] sm:$0xf]
        %v1811 = vld [vmem:[%s6] sm:$0x1]
        %v1813 = vlaneseq
        %v1814 = vshrl.u32 %v1813, 7
        %v1815 = vsub.s32 0, %v1814
        %v1816 = vrot.slane %v1811, %v1815
        %v1827 = vunpack.c.l.b16 %v1802
        %v1828 = vunpack.c.l.b16 %v1803
        %v1829 = vunpack.c.l.b16 %v1804
        %v1830 = vunpack.c.l.b16 %v1805
        %v1831 = vunpack.c.l.b16 %v1806
        %v1832 = vunpack.c.l.b16 %v1807
        %v1833 = vunpack.c.l.b16 %v1808
        %v1834 = vunpack.c.l.b16 %v1809
        %v1835 = vunpack.c.l.b16 %v1810
        %v1836 = vpack.c.b16 %v1828, %v1827
        %v1837 = vpack.c.b16 %v1830, %v1829
        %v1838 = vpack.c.b16 %v1832, %v1831
        %v1839 = vpack.c.b16 %v1834, %v1833
        %v1840 = vpack.c.b16 %v1835, %v1835
        %vm1845 = vcmask 588800
        %v1847 = vsel %vm1845, %v1794, 0
        %v1850 = vsel %vm1845, %v1795, 0
        %v1853 = vsel %vm1845, %v1796, 0
        %v1856 = vsel %vm1845, %v1797, 0
        %v1859 = vsel %vm1845, %v1798, 0
        %v1862 = vsel %vm1845, %v1799, 0
        %v1865 = vsel %vm1845, %v1800, 0
        %v1868 = vsel %vm1845, %v1801, 0
        %v1871 = vsel %vm891, %v1840, 0
        %1873 = vmatprep.subr.bf16.mxu0 0
        %1874 = vmatpush1.bf16.msra.mxu0 %v1836
        %1875 = vmatprep.subr.bf16.mxu0 0
        %1876 = vmatpush1.bf16.msra.mxu0 %v1837
        %1877 = vmatprep.subr.bf16.mxu0 0
        %1878 = vmatpush1.bf16.msra.mxu0 %v1838
        %1879 = vmatprep.subr.bf16.mxu0 0
        %1880 = vmatpush1.bf16.msra.mxu0 %v1839
        %1881 = vmatprep.subr.bf16.mxu0 0
        %1882 = vmatpush1.bf16.msra.mxu0 %v1871
        %1883 = vmatprep.subr.bf16.mxu0 0
        %1884 = vmatpush1.bf16.msra.mxu0 0
        %1885 = vmatprep.subr.bf16.mxu0 0
        %1886 = vmatpush1.bf16.msra.mxu0 0
        %1887 = vmatprep.subr.bf16.mxu0 0
        %1888 = vmatpush1.bf16.msra.mxu0 0
        %1889 = vmatprep.subr.bf16.mxu0 0
        %1890 = vmatpush1.bf16.msra.mxu0 0
        %1891 = vmatprep.subr.bf16.mxu0 0
        %1892 = vmatpush1.bf16.msra.mxu0 0
        %1893 = vmatprep.subr.bf16.mxu0 0
        %1894 = vmatpush1.bf16.msra.mxu0 0
        %1895 = vmatprep.subr.bf16.mxu0 0
        %1896 = vmatpush1.bf16.msra.mxu0 0
        %1897 = vmatprep.subr.bf16.mxu0 0
        %1898 = vmatpush1.bf16.msra.mxu0 0
        %1899 = vmatprep.subr.bf16.mxu0 0
        %1900 = vmatpush1.bf16.msra.mxu0 0
        %1901 = vmatprep.subr.bf16.mxu0 0
        %1902 = vmatpush1.bf16.msra.mxu0 0
        %1903 = vmatprep.subr.bf16.mxu0 0
        %1904 = vmatpush1.bf16.msra.mxu0 0
        %1905 = vmatprep.mubr.bf16.mxu0 0
        %1906 = vmatmul.mubr.bf16.gmra.mrb[0].mxu0 %v1847
        %v1907 = vpop.f32.mrb[0].mxu0
        %v1908 = vadd.f32 %v1816, %v1907
        %v1909 = vpop.f32.mrb[0].mxu0
        %v1910 = vpop.f32.mrb[0].mxu0
        %v1911 = vadd.f32 %v1816, %v1910
        %v1912 = vpop.f32.mrb[0].mxu0
        %1913 = vmatprep.mubr.bf16.mxu0 0
        %1914 = vmatmul.mubr.bf16.gmra.mrb[0].mxu0 %v1850
        %v1915 = vpop.f32.mrb[0].mxu0
        %v1916 = vadd.f32 %v1816, %v1915
        %v1917 = vpop.f32.mrb[0].mxu0
        %v1918 = vpop.f32.mrb[0].mxu0
        %v1919 = vadd.f32 %v1816, %v1918
        %v1920 = vpop.f32.mrb[0].mxu0
        %1921 = vmatprep.mubr.bf16.mxu0 0
        %1922 = vmatmul.mubr.bf16.gmra.mrb[0].mxu0 %v1853
        %v1923 = vpop.f32.mrb[0].mxu0
        %v1924 = vadd.f32 %v1816, %v1923
        %v1925 = vpop.f32.mrb[0].mxu0
        %v1926 = vpop.f32.mrb[0].mxu0
        %v1927 = vadd.f32 %v1816, %v1926
        %v1928 = vpop.f32.mrb[0].mxu0
        %1929 = vmatprep.mubr.bf16.mxu0 0
        %1930 = vmatmul.mubr.bf16.gmra.mrb[0].mxu0 %v1856
        %v1931 = vpop.f32.mrb[0].mxu0
        %v1932 = vadd.f32 %v1816, %v1931
        %v1933 = vpop.f32.mrb[0].mxu0
        %v1934 = vpop.f32.mrb[0].mxu0
        %v1935 = vadd.f32 %v1816, %v1934
        %v1936 = vpop.f32.mrb[0].mxu0
        %1937 = vmatprep.mubr.bf16.mxu0 0
        %1938 = vmatmul.mubr.bf16.gmra.mrb[0].mxu0 %v1859
        %v1939 = vpop.f32.mrb[0].mxu0
        %v1940 = vadd.f32 %v1816, %v1939
        %v1941 = vpop.f32.mrb[0].mxu0
        %v1942 = vpop.f32.mrb[0].mxu0
        %v1943 = vadd.f32 %v1816, %v1942
        %v1944 = vpop.f32.mrb[0].mxu0
        %1945 = vmatprep.mubr.bf16.mxu0 0
        %1946 = vmatmul.mubr.bf16.gmra.mrb[0].mxu0 %v1862
        %v1947 = vpop.f32.mrb[0].mxu0
        %v1948 = vadd.f32 %v1816, %v1947
        %v1949 = vpop.f32.mrb[0].mxu0
        %v1950 = vpop.f32.mrb[0].mxu0
        %v1951 = vadd.f32 %v1816, %v1950
        %v1952 = vpop.f32.mrb[0].mxu0
        %1953 = vmatprep.mubr.bf16.mxu0 0
        %1954 = vmatmul.mubr.bf16.gmra.mrb[0].mxu0 %v1865
        %v1955 = vpop.f32.mrb[0].mxu0
        %v1956 = vadd.f32 %v1816, %v1955
        %v1957 = vpop.f32.mrb[0].mxu0
        %v1958 = vpop.f32.mrb[0].mxu0
        %v1959 = vadd.f32 %v1816, %v1958
        %v1960 = vpop.f32.mrb[0].mxu0
        %1961 = vmatprep.mubr.bf16.mxu0 0
        %1962 = vmatmul.mubr.bf16.gmra.mrb[0].mxu0 %v1868
        %v1963 = vpop.f32.mrb[0].mxu0
        %v1964 = vadd.f32 %v1816, %v1963
        %v1965 = vpop.f32.mrb[0].mxu0
        %v1966 = vpop.f32.mrb[0].mxu0
        %v1967 = vadd.f32 %v1816, %v1966
        %v1968 = vpop.f32.mrb[0].mxu0
        %1969 = vdwg.mxu0
        %v1970 = vmax.f32 %v1908, 0.0
        %v1971 = vmax.f32 %v1911, 0.0
        %v1972 = vmax.f32 %v1916, 0.0
        %v1973 = vmax.f32 %v1919, 0.0
        %v1974 = vmax.f32 %v1924, 0.0
        %v1975 = vmax.f32 %v1927, 0.0
        %v1976 = vmax.f32 %v1932, 0.0
        %v1977 = vmax.f32 %v1935, 0.0
        %v1978 = vmax.f32 %v1940, 0.0
        %v1979 = vmax.f32 %v1943, 0.0
        %v1980 = vmax.f32 %v1948, 0.0
        %v1981 = vmax.f32 %v1951, 0.0
        %v1982 = vmax.f32 %v1956, 0.0
        %v1983 = vmax.f32 %v1959, 0.0
        %v1984 = vmax.f32 %v1964, 0.0
        %v1985 = vmax.f32 %v1967, 0.0
        %v1986 = vld [vmem:[%s9] sm:$0x1]
        %v1988 = vlaneseq
        %v1989 = vshrl.u32 %v1988, 7
        %v1990 = vsub.s32 0, %v1989
        %v1991 = vrot.slane %v1986, %v1990
        %v1993 = vmul.f32 %v1970, %v1991
        %v1994 = vmul.f32 %v1971, %v1991
        %v1995 = vmul.f32 %v1972, %v1991
        %v1996 = vmul.f32 %v1973, %v1991
        %v1997 = vmul.f32 %v1974, %v1991
        %v1998 = vmul.f32 %v1975, %v1991
        %v1999 = vmul.f32 %v1976, %v1991
        %v2000 = vmul.f32 %v1977, %v1991
        %v2001 = vmul.f32 %v1978, %v1991
        %v2002 = vmul.f32 %v1979, %v1991
        %v2003 = vmul.f32 %v1980, %v1991
        %v2004 = vmul.f32 %v1981, %v1991
        %v2005 = vmul.f32 %v1982, %v1991
        %v2006 = vmul.f32 %v1983, %v1991
        %v2007 = vmul.f32 %v1984, %v1991
        %v2008 = vmul.f32 %v1985, %v1991
        %v2009 = vld [vmem:[%s10] sm:$0x1]
        %v2011 = vlaneseq
        %v2012 = vshrl.u32 %v2011, 7
        %v2013 = vsub.s32 0, %v2012
        %v2014 = vrot.slane %v2009, %v2013
        %v2016 = vadd.f32 %v1993, %v2014
        %v2017 = vadd.f32 %v1994, %v2014
        %v2018 = vadd.f32 %v1995, %v2014
        %v2019 = vadd.f32 %v1996, %v2014
        %v2020 = vadd.f32 %v1997, %v2014
        %v2021 = vadd.f32 %v1998, %v2014
        %v2022 = vadd.f32 %v1999, %v2014
        %v2023 = vadd.f32 %v2000, %v2014
        %v2024 = vadd.f32 %v2001, %v2014
        %v2025 = vadd.f32 %v2002, %v2014
        %v2026 = vadd.f32 %v2003, %v2014
        %v2027 = vadd.f32 %v2004, %v2014
        %v2028 = vadd.f32 %v2005, %v2014
        %v2029 = vadd.f32 %v2006, %v2014
        %v2030 = vadd.f32 %v2007, %v2014
        %v2031 = vadd.f32 %v2008, %v2014
        %2032 = vst.msk [vmem:[%s403] sm:$0xff] %vm866, %v1038
        %2033 = vst.msk [vmem:[%s403 + $0x8] sm:$0xff] %vm866, %v1039
        %2034 = vst.msk [vmem:[%s403 + $0x10] sm:$0xff] %vm866, %v1040
        %2035 = vst.msk [vmem:[%s403 + $0x18] sm:$0xff] %vm866, %v1041
        %2036 = vst.msk [vmem:[%s403 + $0x20] sm:$0xff] %vm866, %v1042
        %2037 = vst.msk [vmem:[%s403 + $0x28] sm:$0xff] %vm866, %v1043
        %2038 = vst.msk [vmem:[%s403 + $0x30] sm:$0xff] %vm866, %v1044
        %2039 = vst.msk [vmem:[%s403 + $0x38] sm:$0xff] %vm866, %v1045
        %2040 = vst.msk [vmem:[%s403 + $0x40] sm:$0xff] %vm866, %v1046
        %2041 = vst.msk [vmem:[%s403 + $0x48] sm:$0xff] %vm866, %v1047
        %2042 = vst.msk [vmem:[%s403 + $0x50] sm:$0xff] %vm866, %v1048
        %2043 = vst.msk [vmem:[%s403 + $0x58] sm:$0xff] %vm866, %v1049
        %2044 = vst.msk [vmem:[%s403 + $0x60] sm:$0xff] %vm866, %v1050
        %2045 = vst.msk [vmem:[%s403 + $0x68] sm:$0xff] %vm866, %v1051
        %2046 = vst.msk [vmem:[%s403 + $0x70] sm:$0xff] %vm866, %v1052
        %2047 = vst.msk [vmem:[%s403 + $0x78] sm:$0xff] %vm866, %v1053
        %2064 = vrot.lane.b32.xlu0 %v2016, 8
        %v2065 = vpop.permute.xlu0 %2064
        %2066 = vrot.lane.b32.xlu0 %v2017, 8
        %v2067 = vpop.permute.xlu0 %2066
        %2068 = vrot.lane.b32.xlu0 %v2018, 8
        %v2069 = vpop.permute.xlu0 %2068
        %2070 = vrot.lane.b32.xlu0 %v2019, 8
        %v2071 = vpop.permute.xlu0 %2070
        %2072 = vrot.lane.b32.xlu0 %v2020, 8
        %v2073 = vpop.permute.xlu0 %2072
        %2074 = vrot.lane.b32.xlu0 %v2021, 8
        %v2075 = vpop.permute.xlu0 %2074
        %2076 = vrot.lane.b32.xlu0 %v2022, 8
        %v2077 = vpop.permute.xlu0 %2076
        %2078 = vrot.lane.b32.xlu0 %v2023, 8
        %v2079 = vpop.permute.xlu0 %2078
        %2080 = vrot.lane.b32.xlu0 %v2024, 8
        %v2081 = vpop.permute.xlu0 %2080
        %2082 = vrot.lane.b32.xlu0 %v2025, 8
        %v2083 = vpop.permute.xlu0 %2082
        %2084 = vrot.lane.b32.xlu0 %v2026, 8
        %v2085 = vpop.permute.xlu0 %2084
        %2086 = vrot.lane.b32.xlu0 %v2027, 8
        %v2087 = vpop.permute.xlu0 %2086
        %2088 = vrot.lane.b32.xlu0 %v2028, 8
        %v2089 = vpop.permute.xlu0 %2088
        %2090 = vrot.lane.b32.xlu0 %v2029, 8
        %v2091 = vpop.permute.xlu0 %2090
        %2092 = vrot.lane.b32.xlu0 %v2030, 8
        %v2093 = vpop.permute.xlu0 %2092
        %2094 = vrot.lane.b32.xlu0 %v2031, 8
        %v2095 = vpop.permute.xlu0 %2094
        %vm2112 = vcmask 130112
        %2113 = vst.msk [vmem:[%s403] sm:$0xff] %vm2112, %v2065
        %2114 = vst.msk [vmem:[%s403 + $0x8] sm:$0xff] %vm2112, %v2067
        %2115 = vst.msk [vmem:[%s403 + $0x10] sm:$0xff] %vm2112, %v2069
        %2116 = vst.msk [vmem:[%s403 + $0x18] sm:$0xff] %vm2112, %v2071
        %2117 = vst.msk [vmem:[%s403 + $0x20] sm:$0xff] %vm2112, %v2073
        %2118 = vst.msk [vmem:[%s403 + $0x28] sm:$0xff] %vm2112, %v2075
        %2119 = vst.msk [vmem:[%s403 + $0x30] sm:$0xff] %vm2112, %v2077
        %2120 = vst.msk [vmem:[%s403 + $0x38] sm:$0xff] %vm2112, %v2079
        %2121 = vst.msk [vmem:[%s403 + $0x40] sm:$0xff] %vm2112, %v2081
        %2122 = vst.msk [vmem:[%s403 + $0x48] sm:$0xff] %vm2112, %v2083
        %2123 = vst.msk [vmem:[%s403 + $0x50] sm:$0xff] %vm2112, %v2085
        %2124 = vst.msk [vmem:[%s403 + $0x58] sm:$0xff] %vm2112, %v2087
        %2125 = vst.msk [vmem:[%s403 + $0x60] sm:$0xff] %vm2112, %v2089
        %2126 = vst.msk [vmem:[%s403 + $0x68] sm:$0xff] %vm2112, %v2091
        %2127 = vst.msk [vmem:[%s403 + $0x70] sm:$0xff] %vm2112, %v2093
        %2128 = vst.msk [vmem:[%s403 + $0x78] sm:$0xff] %vm2112, %v2095
        %s2129 = sand.u32 %s285, 1
        %s2130 = scalar_lea.sflag [#allocation3], %s2129
        %s2131 = sand.u32 %s285, 1
        %s2132 = smul.addr %s2131, 128
        %s2133 = scalar_lea.vmem [#allocation2], %s2132
        // Predicated region
        $region65: #{tpu_custom_call.1} parent=63 // pred_check
          %p2134 = pneg %p295
        $region66: #{tpu_custom_call.1} parent=63 // pred_check_branch
          %2136 = sbr.rel (%p2134) target = $region68
        $region67: #{tpu_custom_call.1} parent=63 // pred_region
          %s2137 = smul.u32 8, %s30
          %s2139 = ssub.s32 2048, 2048
          %2140 = vsyncadd %s2130, %s2139
          %s2141 = smul.addr %s2137, 2
          %s2142 = smul.addr %s29, 32
          %s2143 = sadd.s32 %s2141, %s2142
          %s2144 = smul.addr %s2143, 128
          %s2145 = scalar_lea.hbm %s11, %s2144
          %s2146 = sshll.u32 %s2133, 4
          %s2147 = int_to_ptr.vmem [resolvable:$true] %s2146
          %2152 = dma.vmem_to_hbm [thread:$0]  %s2147, 2048, %s2145, %s2130, 128, 128, 8
        $region68: #{tpu_custom_call.1} parent=63 // pred_fallthru
          _
      $region64: #{tpu_custom_call.1} parent=5 // pred_fallthru
        _
      %p2153 = scmp.le.s32.totalorder 2, %s20
      // Predicated region
      $region69: #{tpu_custom_call.1} parent=5 // pred_check
        %p2154 = pneg %p2153
      $region70: #{tpu_custom_call.1} parent=5 // pred_check_branch
        %2156 = sbr.rel (%p2154) target = $region72
      $region71: #{tpu_custom_call.1} parent=5 // pred_region
        %s2157 = ssub.s32 %s20, 2
        // Predicated region
        $region73: #{tpu_custom_call.1} parent=71 // pred_check
          %p2158 = pneg %p301
        $region74: #{tpu_custom_call.1} parent=71 // pred_check_branch
          %2160 = sbr.rel (%p2158) target = $region76
        $region75: #{tpu_custom_call.1} parent=71 // pred_region
          %s2161 = sand.u32 %s286, 1
          %s2162 = scalar_lea.sflag [#allocation3], %s2161
          %s2163 = sand.u32 %s286, 1
          %s2164 = smul.addr %s2163, 128
          %s2165 = scalar_lea.vmem [#allocation2], %s2164
          %2166 = dma.done %s2162, 2048
        $region76: #{tpu_custom_call.1} parent=71 // pred_fallthru
          _
      $region72: #{tpu_custom_call.1} parent=5 // pred_fallthru
        _
    $region6: #{tpu_custom_call.1} parent=1 // loop_footer
      %s24 = sadd.s32 1, %s20
    $region7: #{tpu_custom_call.1} parent=1 // loop_footer_branch
      %19 = sbr.rel target = $region3
    $region8: #{tpu_custom_call.1} parent=1 // loop_exit
      _
    %2167 = vsyncpa [#allocation3], 1
    %s2168 = scalar_lea.sflag [#allocation3], 1
    %2169 = vsyncpa %s2168, 1

</llo_original>
